<compile_context>
chip_gen: v7x
topology: tpu7x:2x2x1
jax: 0.10.0
libtpu: 0.0.40
codegen_flags: <defaults>
</compile_context>

<pallas_src>
import math

import jax
import jax.numpy as jnp
from jax import lax
from jax.experimental import pallas as pl
from jax.experimental.pallas import tpu as pltpu

_NEG = -1e30  # plain Python float: becomes an in-trace literal, not a captured const


def _tpu_generation_params():
    """Generation-aware (vmem_limit_bytes, use_bf16_exp). Conservative defaults."""
    kind = ""
    try:
        kind = jax.devices()[0].device_kind.lower()
    except Exception:
        pass
    if "v7" in kind:
        return 48 * 1024 * 1024, True       # 64 MiB physical: leave headroom
    if "v6" in kind:
        return 100 * 1024 * 1024, True      # 128 MiB physical
    if "v5" in kind:
        return 100 * 1024 * 1024, False     # v5e EUP has no bf16 path
    return 64 * 1024 * 1024, False          # unknown / interpret: safe defaults


def _make_kernel(block, head_dim, num_kv, bf16_exp):
    D = head_dim
    D2 = D // 2
    scale = 1.0 / math.sqrt(D)

    def _rope(x, cos, sin):
        # x: (block, D) f32 ; cos/sin: (block, D//2) f32 — same math as apply_rotary_emb.
        x1 = x[:, :D2]
        x2 = x[:, D2:]
        return jnp.concatenate([x1 * cos + x2 * sin, x2 * cos - x1 * sin], axis=-1)

    def kernel(x_ref, wq_ref, wk_ref, wv_ref, wo_ref, cos_ref, sin_ref,
               o_ref, q_scr, m_scr, l_scr, acc_scr, k_cache, v_cache):
        qi = pl.program_id(1)     # query-tile index
        h = pl.program_id(2)      # head index
        kv = pl.program_id(3)     # kv-tile index
        cache_idx = h * num_kv + kv

        # Zero the resident (1, block, C) f32 output block once per (b, q-tile).
        @pl.when(jnp.logical_and(h == 0, kv == 0))
        def _():
            o_ref[...] = jnp.zeros(o_ref.shape, o_ref.dtype)

        def _online_softmax_update(k, v, masked):
            # k, v: (block, D) bf16. `masked` is a Python bool (diagonal tile only),
            # so off-diagonal tiles pay no iota/compare/select work at all.
            q = q_scr[...]                                                   # (block, D) bf16
            s = lax.dot_general(q, k, (((1,), (1,)), ((), ())),
                                preferred_element_type=jnp.float32)          # (block, block)
            if masked:
                row = lax.broadcasted_iota(jnp.int32, (block, block), 0)
                col = lax.broadcasted_iota(jnp.int32, (block, block), 1)
                s = jnp.where(row >= col, s, _NEG)
            m_prev = m_scr[...]
            m_new = jnp.maximum(m_prev, jnp.max(s, axis=-1, keepdims=True))
            alpha = jnp.exp(m_prev - m_new)
            if bf16_exp:
                p = jnp.exp((s - m_new).astype(jnp.bfloat16))                # bf16 EUP rate
                l_new = jnp.sum(p, axis=-1, keepdims=True, dtype=jnp.float32)
                pv = jnp.dot(p, v, preferred_element_type=jnp.float32)
            else:
                p = jnp.exp(s - m_new)                                       # f32 EUP (v5e)
                l_new = jnp.sum(p, axis=-1, keepdims=True)
                pv = jnp.dot(p.astype(jnp.bfloat16), v,
                             preferred_element_type=jnp.float32)
            l_scr[...] = alpha * l_scr[...] + l_new
            acc_scr[...] = alpha * acc_scr[...] + pv
            m_scr[...] = m_new

        # Causal skip: KV tiles strictly above the diagonal have no work.
        @pl.when(kv <= qi)
        def _():
            x_blk = x_ref[0]                                                 # (block, C) bf16

            # First active KV tile: project + rotate + scale Q once; reset state.
            @pl.when(kv == 0)
            def _():
                q = jnp.dot(x_blk, wq_ref[0], preferred_element_type=jnp.float32)
                q = _rope(q, cos_ref[...], sin_ref[...]) * scale
                q_scr[...] = q.astype(jnp.bfloat16)
                m_scr[...] = jnp.full(m_scr.shape, _NEG, m_scr.dtype)
                l_scr[...] = jnp.zeros(l_scr.shape, l_scr.dtype)
                acc_scr[...] = jnp.zeros(acc_scr.shape, acc_scr.dtype)

            # Diagonal tile: its KV rows are exactly the resident query rows, so
            # project K/V from the same x block, cache them for later q-tiles of
            # this (batch, head), and attend with the triangular mask.
            @pl.when(kv == qi)
            def _():
                k = jnp.dot(x_blk, wk_ref[0], preferred_element_type=jnp.float32)
                k = _rope(k, cos_ref[...], sin_ref[...]).astype(jnp.bfloat16)
                v = jnp.dot(x_blk, wv_ref[0],
                            preferred_element_type=jnp.float32).astype(jnp.bfloat16)
                k_cache[cache_idx] = k
                v_cache[cache_idx] = v
                _online_softmax_update(k, v, masked=True)

            # Below-diagonal tiles: K/V already cached (same batch/head, earlier
            # q-tile); no mask needed.
            @pl.when(kv < qi)
            def _():
                _online_softmax_update(k_cache[cache_idx], v_cache[cache_idx],
                                       masked=False)

            # Last active tile for this (q-tile, head): normalize (exact divide)
            # and fold this head directly into the output projection accumulator.
            @pl.when(kv == qi)
            def _():
                y_h = acc_scr[...] / l_scr[...]                              # (block, D) f32
                o_ref[0] += jnp.dot(y_h.astype(jnp.bfloat16), wo_ref[0],
                                    preferred_element_type=jnp.float32)

    return kernel


def causal_self_attention(x, w_attn, w_proj, n_head, *, block=None):
    """x: (B, T, C) f32; w_attn: (C, 3C) (= c_attn.weight.T); w_proj: (C, C) (= c_proj.weight.T)."""
    B, T, C = x.shape
    assert C % n_head == 0
    D = C // n_head
    assert D % 2 == 0
    if block is None:
        block = min(T, 512)
    assert T % block == 0, "T must be a multiple of the tile size"
    num_t = T // block            # number of query tiles == number of KV tiles

    # Rotary tables (tiny, plain-JAX setup, outside the kernel).
    inv_freq = 1.0 / (10000.0 ** (jnp.arange(0, D, 2, dtype=jnp.float32) / D))
    t = jnp.arange(T, dtype=jnp.float32)
    freqs = jnp.outer(t, inv_freq)                   # (T, D//2)
    cos = jnp.cos(freqs)
    sin = jnp.sin(freqs)

    # Per-head, lane-aligned weight slabs; bf16 operands for MXU-native matmuls.
    wq = w_attn[:, 0 * C:1 * C].reshape(C, n_head, D).transpose(1, 0, 2).astype(jnp.bfloat16)
    wk = w_attn[:, 1 * C:2 * C].reshape(C, n_head, D).transpose(1, 0, 2).astype(jnp.bfloat16)
    wv = w_attn[:, 2 * C:3 * C].reshape(C, n_head, D).transpose(1, 0, 2).astype(jnp.bfloat16)
    wo = w_proj.reshape(n_head, D, C).astype(jnp.bfloat16)
    xb = x.astype(jnp.bfloat16)

    vmem_limit, bf16_exp = _tpu_generation_params()
    kernel = _make_kernel(block, D, num_t, bf16_exp)

    return pl.pallas_call(
        kernel,
        out_shape=jax.ShapeDtypeStruct((B, T, C), jnp.float32),
        grid_spec=pltpu.PrefetchScalarGridSpec(
            num_scalar_prefetch=0,
            grid=(B, num_t, n_head, num_t),
            in_specs=[
                pl.BlockSpec((1, block, C), lambda b, qi, h, kv: (b, qi, 0)),  # x tile (Q rows == diag KV rows)
                pl.BlockSpec((1, C, D), lambda b, qi, h, kv: (h, 0, 0)),       # w_q[h]
                pl.BlockSpec((1, C, D), lambda b, qi, h, kv: (h, 0, 0)),       # w_k[h]
                pl.BlockSpec((1, C, D), lambda b, qi, h, kv: (h, 0, 0)),       # w_v[h]
                pl.BlockSpec((1, D, C), lambda b, qi, h, kv: (h, 0, 0)),       # w_proj rows for head h
                pl.BlockSpec((block, D // 2), lambda b, qi, h, kv: (qi, 0)),   # cos rows of this tile
                pl.BlockSpec((block, D // 2), lambda b, qi, h, kv: (qi, 0)),   # sin rows of this tile
            ],
            out_specs=pl.BlockSpec((1, block, C), lambda b, qi, h, kv: (b, qi, 0)),
            scratch_shapes=[
                pltpu.VMEM((block, D), jnp.bfloat16),                    # rotated, scaled q
                pltpu.VMEM((block, 1), jnp.float32),                     # running max m
                pltpu.VMEM((block, 1), jnp.float32),                     # running sum l
                pltpu.VMEM((block, D), jnp.float32),                     # unnormalized attention acc
                pltpu.VMEM((n_head * num_t, block, D), jnp.bfloat16),    # projected+rotated K cache
                pltpu.VMEM((n_head * num_t, block, D), jnp.bfloat16),    # projected V cache
            ],
        ),
        compiler_params=pltpu.CompilerParams(
            # K/V cache carries across q-tiles (and o accumulates across heads),
            # so only the batch axis is safely "parallel" for megacore.
            dimension_semantics=("parallel", "arbitrary", "arbitrary", "arbitrary"),
            vmem_limit_bytes=vmem_limit,
        ),
    )(xb, wq, wk, wv, wo, cos, sin)


def _reference(x, w_attn, w_proj, n_head):
    """Pure-JAX reference replicating the PyTorch forward (bf16-rounded inputs, f32 math)."""
    B, T, C = x.shape
    D = C // n_head
    xf = x.astype(jnp.bfloat16).astype(jnp.float32)
    wa = w_attn.astype(jnp.bfloat16).astype(jnp.float32)
    wp = w_proj.astype(jnp.bfloat16).astype(jnp.float32)

    qkv = xf @ wa                                              # (B, T, 3C)
    q, k, v = jnp.split(qkv, 3, axis=2)
    q = q.reshape(B, T, n_head, D)
    k = k.reshape(B, T, n_head, D)
    v = v.reshape(B, T, n_head, D)

    inv_freq = 1.0 / (10000.0 ** (jnp.arange(0, D, 2, dtype=jnp.float32) / D))
    t = jnp.arange(T, dtype=jnp.float32)
    freqs = jnp.outer(t, inv_freq)
    cos = jnp.cos(freqs)[None, :, None, :]
    sin = jnp.sin(freqs)[None, :, None, :]

    def rope4(x4):
        d = x4.shape[3] // 2
        x1, x2 = x4[..., :d], x4[..., d:]
        return jnp.concatenate([x1 * cos + x2 * sin, -x1 * sin + x2 * cos], axis=3)

    q = rope4(q).transpose(0, 2, 1, 3)                          # (B, H, T, D)
    k = rope4(k).transpose(0, 2, 1, 3)
    v = v.transpose(0, 2, 1, 3)

    s = jnp.einsum("bhtd,bhsd->bhts", q, k) / math.sqrt(D)
    mask = jnp.tril(jnp.ones((T, T), dtype=bool))
    s = jnp.where(mask, s, -jnp.inf)
    p = jax.nn.softmax(s, axis=-1)
    y = jnp.einsum("bhts,bhsd->bhtd", p, v)
    y = y.transpose(0, 2, 1, 3).reshape(B, T, C)
    return y @ wp


if __name__ == "__main__":
    B, T, n_head, head_dim = 2, 8, 4, 8
    C = n_head * head_dim  # 32

    key = jax.random.PRNGKey(0)
    kx, ka, kp = jax.random.split(key, 3)

    x = jax.random.normal(kx, (B, T, C), dtype=jnp.float32)
    # nn.Linear(C, 3C, bias=False).weight is (3C, C); we store its transpose (C, 3C).
    bound = 1.0 / math.sqrt(C)
    w_attn = jax.random.uniform(ka, (C, 3 * C), minval=-bound, maxval=bound, dtype=jnp.float32)
    w_proj = jax.random.uniform(kp, (C, C), minval=-bound, maxval=bound, dtype=jnp.float32)

    out = jax.block_until_ready(causal_self_attention(x, w_attn, w_proj, n_head))
    ref = jax.block_until_ready(_reference(x, w_attn, w_proj, n_head))

    assert out.shape == (B, T, C)
    max_diff = float(jnp.max(jnp.abs(out - ref)))
    assert jnp.allclose(out, ref, atol=5e-2, rtol=5e-2), f"mismatch vs reference (max abs diff {max_diff})"

    print("KERNEL_OK")
</pallas_src>

<mosaic_0001>
module attributes {stable_mosaic.version = 11 : i64} {
  func.func @kernel(%arg0: i32, %arg1: i32, %arg2: i32, %arg3: i32, %arg4: memref<1x8x32xbf16, #tpu.memory_space<vmem>>, %arg5: memref<1x32x8xbf16, #tpu.memory_space<vmem>>, %arg6: memref<1x32x8xbf16, #tpu.memory_space<vmem>>, %arg7: memref<1x32x8xbf16, #tpu.memory_space<vmem>>, %arg8: memref<1x8x32xbf16, #tpu.memory_space<vmem>>, %arg9: memref<8x4xf32, #tpu.memory_space<vmem>>, %arg10: memref<8x4xf32, #tpu.memory_space<vmem>>, %arg11: memref<1x8x32xf32, #tpu.memory_space<vmem>>, %arg12: memref<8x8xbf16, #tpu.memory_space<vmem>>, %arg13: memref<8x1xf32, #tpu.memory_space<vmem>>, %arg14: memref<8x1xf32, #tpu.memory_space<vmem>>, %arg15: memref<8x8xf32, #tpu.memory_space<vmem>>, %arg16: memref<4x8x8xbf16, #tpu.memory_space<vmem>>, %arg17: memref<4x8x8xbf16, #tpu.memory_space<vmem>>) attributes {dimension_semantics = [#tpu.dimension_semantics<parallel>, #tpu.dimension_semantics<arbitrary>, #tpu.dimension_semantics<arbitrary>, #tpu.dimension_semantics<arbitrary>], iteration_bounds = array<i64: 2, 1, 4, 1>, scalar_prefetch = 0 : i64, scratch_operands = 6 : i64, tpu.core_type = #tpu.core_type<tc>, window_params = [{transform_indices = @transform_0, window_bounds = array<i64: 1, 8, 32>}, {transform_indices = @transform_1, window_bounds = array<i64: 1, 32, 8>}, {transform_indices = @transform_2, window_bounds = array<i64: 1, 32, 8>}, {transform_indices = @transform_3, window_bounds = array<i64: 1, 32, 8>}, {transform_indices = @transform_4, window_bounds = array<i64: 1, 8, 32>}, {transform_indices = @transform_5, window_bounds = array<i64: 8, 4>}, {transform_indices = @transform_6, window_bounds = array<i64: 8, 4>}, {transform_indices = @transform_7, window_bounds = array<i64: 1, 8, 32>}]} {
    %c1_i32 = arith.constant 1 : i32
    %0 = arith.muli %arg2, %c1_i32 : i32
    %1 = arith.addi %0, %arg3 : i32
    %c0_i32 = arith.constant 0 : i32
    %2 = arith.cmpi eq, %arg2, %c0_i32 : i32
    %c0_i32_0 = arith.constant 0 : i32
    %3 = arith.cmpi eq, %arg3, %c0_i32_0 : i32
    %4 = arith.andi %2, %3 : i1
    %5 = arith.extui %4 : i1 to i32
    %c0_i32_1 = arith.constant 0 : i32
    %6 = arith.cmpi ne, %5, %c0_i32_1 : i32
    scf.if %6 {
      %cst = arith.constant 0.000000e+00 : f32
      %10 = vector.broadcast %cst : f32 to vector<1x8x32xf32>
      %c0 = arith.constant 0 : index
      %c0_3 = arith.constant 0 : index
      %c0_4 = arith.constant 0 : index
      %11 = vector.load %arg11[%c0, %c0_3, %c0_4] : memref<1x8x32xf32, #tpu.memory_space<vmem>>, vector<1x8x32xf32>
      tpu.vector_store %arg11[%c0, %c0_3, %c0_4], %10 {strides = array<i32>} : memref<1x8x32xf32, #tpu.memory_space<vmem>>, vector<1x8x32xf32>,
    } else {
    }
    %7 = arith.cmpi sle, %arg3, %arg1 : i32
    %8 = arith.extui %7 : i1 to i32
    %c0_i32_2 = arith.constant 0 : i32
    %9 = arith.cmpi ne, %8, %c0_i32_2 : i32
    scf.if %9 {
      %c0 = arith.constant 0 : index
      %c0_3 = arith.constant 0 : index
      %c0_4 = arith.constant 0 : index
      %10 = vector.load %arg4[%c0, %c0_3, %c0_4] : memref<1x8x32xbf16, #tpu.memory_space<vmem>>, vector<1x8x32xbf16>
      %11 = vector.shape_cast %10 : vector<1x8x32xbf16> to vector<8x32xbf16>
      %c0_i32_5 = arith.constant 0 : i32
      %12 = arith.cmpi eq, %arg3, %c0_i32_5 : i32
      %13 = arith.extui %12 : i1 to i32
      %c0_i32_6 = arith.constant 0 : i32
      %14 = arith.cmpi ne, %13, %c0_i32_6 : i32
      scf.if %14 {
        %c0_10 = arith.constant 0 : index
        %c0_11 = arith.constant 0 : index
        %c0_12 = arith.constant 0 : index
        %24 = vector.load %arg5[%c0_10, %c0_11, %c0_12] : memref<1x32x8xbf16, #tpu.memory_space<vmem>>, vector<1x32x8xbf16>
        %25 = vector.shape_cast %24 : vector<1x32x8xbf16> to vector<32x8xbf16>
        %cst = arith.constant dense<0.000000e+00> : vector<8x8xf32>
        %26 = tpu.matmul %11, %25, %cst {dimension_numbers = #tpu.dot_dimension_numbers<[1], [0], [0], [1], [0, 0, 1, 1], [], []>} : vector<8x32xbf16>, vector<32x8xbf16>, vector<8x8xf32> -> vector<8x8xf32>
        %c0_13 = arith.constant 0 : index
        %c0_14 = arith.constant 0 : index
        %27 = vector.load %arg9[%c0_13, %c0_14] : memref<8x4xf32, #tpu.memory_space<vmem>>, vector<8x4xf32>
        %c0_15 = arith.constant 0 : index
        %c0_16 = arith.constant 0 : index
        %28 = vector.load %arg10[%c0_15, %c0_16] : memref<8x4xf32, #tpu.memory_space<vmem>>, vector<8x4xf32>
        %29 = vector.extract_strided_slice %26 {offsets = [0, 0], sizes = [8, 4], strides = [1, 1]} : vector<8x8xf32> to vector<8x4xf32>
        %30 = vector.extract_strided_slice %26 {offsets = [0, 4], sizes = [8, 4], strides = [1, 1]} : vector<8x8xf32> to vector<8x4xf32>
        %31 = arith.mulf %29, %27 : vector<8x4xf32>
        %32 = arith.mulf %30, %28 : vector<8x4xf32>
        %33 = arith.addf %31, %32 : vector<8x4xf32>
        %34 = arith.mulf %30, %27 : vector<8x4xf32>
        %35 = arith.mulf %29, %28 : vector<8x4xf32>
        %36 = arith.subf %34, %35 : vector<8x4xf32>
        %37 = tpu.concatenate %33, %36 in 1 : vector<8x4xf32>, vector<8x4xf32> -> vector<8x8xf32>
        %cst_17 = arith.constant 0.353553385 : f32
        %38 = vector.broadcast %cst_17 : f32 to vector<8x8xf32>
        %39 = arith.mulf %37, %38 : vector<8x8xf32>
        %40 = arith.truncf %39 : vector<8x8xf32> to vector<8x8xbf16>
        %c0_18 = arith.constant 0 : index
        %c0_19 = arith.constant 0 : index
        %41 = vector.load %arg12[%c0_18, %c0_19] : memref<8x8xbf16, #tpu.memory_space<vmem>>, vector<8x8xbf16>
        tpu.vector_store %arg12[%c0_18, %c0_19], %40 {strides = array<i32>} : memref<8x8xbf16, #tpu.memory_space<vmem>>, vector<8x8xbf16>,
        %cst_20 = arith.constant -1.000000e+30 : f32
        %42 = vector.broadcast %cst_20 : f32 to vector<8x1xf32>
        %c0_21 = arith.constant 0 : index
        %c0_22 = arith.constant 0 : index
        %43 = vector.load %arg13[%c0_21, %c0_22] : memref<8x1xf32, #tpu.memory_space<vmem>>, vector<8x1xf32>
        tpu.vector_store %arg13[%c0_21, %c0_22], %42 {strides = array<i32>} : memref<8x1xf32, #tpu.memory_space<vmem>>, vector<8x1xf32>,
        %cst_23 = arith.constant 0.000000e+00 : f32
        %44 = vector.broadcast %cst_23 : f32 to vector<8x1xf32>
        %c0_24 = arith.constant 0 : index
        %c0_25 = arith.constant 0 : index
        %45 = vector.load %arg14[%c0_24, %c0_25] : memref<8x1xf32, #tpu.memory_space<vmem>>, vector<8x1xf32>
        tpu.vector_store %arg14[%c0_24, %c0_25], %44 {strides = array<i32>} : memref<8x1xf32, #tpu.memory_space<vmem>>, vector<8x1xf32>,
        %cst_26 = arith.constant 0.000000e+00 : f32
        %46 = vector.broadcast %cst_26 : f32 to vector<8x8xf32>
        %c0_27 = arith.constant 0 : index
        %c0_28 = arith.constant 0 : index
        %47 = vector.load %arg15[%c0_27, %c0_28] : memref<8x8xf32, #tpu.memory_space<vmem>>, vector<8x8xf32>
        tpu.vector_store %arg15[%c0_27, %c0_28], %46 {strides = array<i32>} : memref<8x8xf32, #tpu.memory_space<vmem>>, vector<8x8xf32>,
      } else {
      }
      %15 = arith.cmpi eq, %arg3, %arg1 : i32
      %16 = arith.extui %15 : i1 to i32
      %c0_i32_7 = arith.constant 0 : i32
      %17 = arith.cmpi ne, %16, %c0_i32_7 : i32
      scf.if %17 {
        %c0_10 = arith.constant 0 : index
        %c0_11 = arith.constant 0 : index
        %c0_12 = arith.constant 0 : index
        %24 = vector.load %arg6[%c0_10, %c0_11, %c0_12] : memref<1x32x8xbf16, #tpu.memory_space<vmem>>, vector<1x32x8xbf16>
        %25 = vector.shape_cast %24 : vector<1x32x8xbf16> to vector<32x8xbf16>
        %cst = arith.constant dense<0.000000e+00> : vector<8x8xf32>
        %26 = tpu.matmul %11, %25, %cst {dimension_numbers = #tpu.dot_dimension_numbers<[1], [0], [0], [1], [0, 0, 1, 1], [], []>} : vector<8x32xbf16>, vector<32x8xbf16>, vector<8x8xf32> -> vector<8x8xf32>
        %c0_13 = arith.constant 0 : index
        %c0_14 = arith.constant 0 : index
        %27 = vector.load %arg9[%c0_13, %c0_14] : memref<8x4xf32, #tpu.memory_space<vmem>>, vector<8x4xf32>
        %c0_15 = arith.constant 0 : index
        %c0_16 = arith.constant 0 : index
        %28 = vector.load %arg10[%c0_15, %c0_16] : memref<8x4xf32, #tpu.memory_space<vmem>>, vector<8x4xf32>
        %29 = vector.extract_strided_slice %26 {offsets = [0, 0], sizes = [8, 4], strides = [1, 1]} : vector<8x8xf32> to vector<8x4xf32>
        %30 = vector.extract_strided_slice %26 {offsets = [0, 4], sizes = [8, 4], strides = [1, 1]} : vector<8x8xf32> to vector<8x4xf32>
        %31 = arith.mulf %29, %27 : vector<8x4xf32>
        %32 = arith.mulf %30, %28 : vector<8x4xf32>
        %33 = arith.addf %31, %32 : vector<8x4xf32>
        %34 = arith.mulf %30, %27 : vector<8x4xf32>
        %35 = arith.mulf %29, %28 : vector<8x4xf32>
        %36 = arith.subf %34, %35 : vector<8x4xf32>
        %37 = tpu.concatenate %33, %36 in 1 : vector<8x4xf32>, vector<8x4xf32> -> vector<8x8xf32>
        %38 = arith.truncf %37 : vector<8x8xf32> to vector<8x8xbf16>
        %c0_17 = arith.constant 0 : index
        %c0_18 = arith.constant 0 : index
        %c0_19 = arith.constant 0 : index
        %39 = vector.load %arg7[%c0_17, %c0_18, %c0_19] : memref<1x32x8xbf16, #tpu.memory_space<vmem>>, vector<1x32x8xbf16>
        %40 = vector.shape_cast %39 : vector<1x32x8xbf16> to vector<32x8xbf16>
        %cst_20 = arith.constant dense<0.000000e+00> : vector<8x8xf32>
        %41 = tpu.matmul %11, %40, %cst_20 {dimension_numbers = #tpu.dot_dimension_numbers<[1], [0], [0], [1], [0, 0, 1, 1], [], []>} : vector<8x32xbf16>, vector<32x8xbf16>, vector<8x8xf32> -> vector<8x8xf32>
        %42 = arith.truncf %41 : vector<8x8xf32> to vector<8x8xbf16>
        %43 = arith.index_cast %1 : i32 to index
        %c0_21 = arith.constant 0 : index
        %c0_22 = arith.constant 0 : index
        %44 = vector.load %arg16[%43, %c0_21, %c0_22] : memref<4x8x8xbf16, #tpu.memory_space<vmem>>, vector<1x8x8xbf16>
        %45 = vector.shape_cast %44 : vector<1x8x8xbf16> to vector<8x8xbf16>
        %46 = vector.shape_cast %38 : vector<8x8xbf16> to vector<1x8x8xbf16>
        tpu.vector_store %arg16[%43, %c0_21, %c0_22], %46 {strides = array<i32>} : memref<4x8x8xbf16, #tpu.memory_space<vmem>>, vector<1x8x8xbf16>,
        %47 = arith.index_cast %1 : i32 to index
        %c0_23 = arith.constant 0 : index
        %c0_24 = arith.constant 0 : index
        %48 = vector.load %arg17[%47, %c0_23, %c0_24] : memref<4x8x8xbf16, #tpu.memory_space<vmem>>, vector<1x8x8xbf16>
        %49 = vector.shape_cast %48 : vector<1x8x8xbf16> to vector<8x8xbf16>
        %50 = vector.shape_cast %42 : vector<8x8xbf16> to vector<1x8x8xbf16>
        tpu.vector_store %arg17[%47, %c0_23, %c0_24], %50 {strides = array<i32>} : memref<4x8x8xbf16, #tpu.memory_space<vmem>>, vector<1x8x8xbf16>,
        %c0_25 = arith.constant 0 : index
        %c0_26 = arith.constant 0 : index
        %51 = vector.load %arg12[%c0_25, %c0_26] : memref<8x8xbf16, #tpu.memory_space<vmem>>, vector<8x8xbf16>
        %cst_27 = arith.constant dense<0.000000e+00> : vector<8x8xf32>
        %52 = tpu.matmul %51, %38, %cst_27 {dimension_numbers = #tpu.dot_dimension_numbers<[1], [1], [0], [0], [0, 0, 1, 0], [], []>} : vector<8x8xbf16>, vector<8x8xbf16>, vector<8x8xf32> -> vector<8x8xf32>
        %53 = tpu.iota {dimensions = array<i32: 0>} : vector<8x8xi32>
        %54 = tpu.iota {dimensions = array<i32: 1>} : vector<8x8xi32>
        %55 = arith.cmpi sge, %53, %54 : vector<8x8xi32>
        %cst_28 = arith.constant -1.000000e+30 : f32
        %56 = vector.broadcast %cst_28 : f32 to vector<8x8xf32>
        %57 = arith.select %55, %52, %56 : vector<8x8xi1>, vector<8x8xf32>
        %c0_29 = arith.constant 0 : index
        %c0_30 = arith.constant 0 : index
        %58 = vector.load %arg13[%c0_29, %c0_30] : memref<8x1xf32, #tpu.memory_space<vmem>>, vector<8x1xf32>
        %cst_31 = arith.constant dense<0xFF800000> : vector<8xf32>
        %59 = vector.multi_reduction <maximumf>, %57, %cst_31 [1] : vector<8x8xf32> to vector<8xf32>
        %60 = vector.shape_cast %59 : vector<8xf32> to vector<8x1xf32>
        %61 = arith.maximumf %58, %60 : vector<8x1xf32>
        %62 = arith.subf %58, %61 : vector<8x1xf32>
        %63 = math.exp %62 : vector<8x1xf32>
        %64 = vector.broadcast %61 : vector<8x1xf32> to vector<8x8xf32>
        %65 = arith.subf %57, %64 : vector<8x8xf32>
        %66 = math.exp %65 : vector<8x8xf32>
        %cst_32 = arith.constant dense<0.000000e+00> : vector<8xf32>
        %67 = vector.multi_reduction <add>, %66, %cst_32 [1] : vector<8x8xf32> to vector<8xf32>
        %68 = vector.shape_cast %67 : vector<8xf32> to vector<8x1xf32>
        %69 = arith.truncf %66 : vector<8x8xf32> to vector<8x8xbf16>
        %cst_33 = arith.constant dense<0.000000e+00> : vector<8x8xf32>
        %70 = tpu.matmul %69, %42, %cst_33 {dimension_numbers = #tpu.dot_dimension_numbers<[1], [0], [0], [1], [0, 0, 1, 1], [], []>} : vector<8x8xbf16>, vector<8x8xbf16>, vector<8x8xf32> -> vector<8x8xf32>
        %c0_34 = arith.constant 0 : index
        %c0_35 = arith.constant 0 : index
        %71 = vector.load %arg14[%c0_34, %c0_35] : memref<8x1xf32, #tpu.memory_space<vmem>>, vector<8x1xf32>
        %72 = arith.mulf %63, %71 : vector<8x1xf32>
        %73 = arith.addf %72, %68 : vector<8x1xf32>
        %c0_36 = arith.constant 0 : index
        %c0_37 = arith.constant 0 : index
        %74 = vector.load %arg14[%c0_36, %c0_37] : memref<8x1xf32, #tpu.memory_space<vmem>>, vector<8x1xf32>
        tpu.vector_store %arg14[%c0_36, %c0_37], %73 {strides = array<i32>} : memref<8x1xf32, #tpu.memory_space<vmem>>, vector<8x1xf32>,
        %c0_38 = arith.constant 0 : index
        %c0_39 = arith.constant 0 : index
        %75 = vector.load %arg15[%c0_38, %c0_39] : memref<8x8xf32, #tpu.memory_space<vmem>>, vector<8x8xf32>
        %76 = vector.broadcast %63 : vector<8x1xf32> to vector<8x8xf32>
        %77 = arith.mulf %76, %75 : vector<8x8xf32>
        %78 = arith.addf %77, %70 : vector<8x8xf32>
        %c0_40 = arith.constant 0 : index
        %c0_41 = arith.constant 0 : index
        %79 = vector.load %arg15[%c0_40, %c0_41] : memref<8x8xf32, #tpu.memory_space<vmem>>, vector<8x8xf32>
        tpu.vector_store %arg15[%c0_40, %c0_41], %78 {strides = array<i32>} : memref<8x8xf32, #tpu.memory_space<vmem>>, vector<8x8xf32>,
        %c0_42 = arith.constant 0 : index
        %c0_43 = arith.constant 0 : index
        %80 = vector.load %arg13[%c0_42, %c0_43] : memref<8x1xf32, #tpu.memory_space<vmem>>, vector<8x1xf32>
        tpu.vector_store %arg13[%c0_42, %c0_43], %61 {strides = array<i32>} : memref<8x1xf32, #tpu.memory_space<vmem>>, vector<8x1xf32>,
      } else {
      }
      %18 = arith.cmpi slt, %arg3, %arg1 : i32
      %19 = arith.extui %18 : i1 to i32
      %c0_i32_8 = arith.constant 0 : i32
      %20 = arith.cmpi ne, %19, %c0_i32_8 : i32
      scf.if %20 {
        %24 = arith.index_cast %1 : i32 to index
        %c0_10 = arith.constant 0 : index
        %c0_11 = arith.constant 0 : index
        %25 = vector.load %arg16[%24, %c0_10, %c0_11] : memref<4x8x8xbf16, #tpu.memory_space<vmem>>, vector<1x8x8xbf16>
        %26 = vector.shape_cast %25 : vector<1x8x8xbf16> to vector<8x8xbf16>
        %27 = arith.index_cast %1 : i32 to index
        %c0_12 = arith.constant 0 : index
        %c0_13 = arith.constant 0 : index
        %28 = vector.load %arg17[%27, %c0_12, %c0_13] : memref<4x8x8xbf16, #tpu.memory_space<vmem>>, vector<1x8x8xbf16>
        %29 = vector.shape_cast %28 : vector<1x8x8xbf16> to vector<8x8xbf16>
        %c0_14 = arith.constant 0 : index
        %c0_15 = arith.constant 0 : index
        %30 = vector.load %arg12[%c0_14, %c0_15] : memref<8x8xbf16, #tpu.memory_space<vmem>>, vector<8x8xbf16>
        %cst = arith.constant dense<0.000000e+00> : vector<8x8xf32>
        %31 = tpu.matmul %30, %26, %cst {dimension_numbers = #tpu.dot_dimension_numbers<[1], [1], [0], [0], [0, 0, 1, 0], [], []>} : vector<8x8xbf16>, vector<8x8xbf16>, vector<8x8xf32> -> vector<8x8xf32>
        %c0_16 = arith.constant 0 : index
        %c0_17 = arith.constant 0 : index
        %32 = vector.load %arg13[%c0_16, %c0_17] : memref<8x1xf32, #tpu.memory_space<vmem>>, vector<8x1xf32>
        %cst_18 = arith.constant dense<0xFF800000> : vector<8xf32>
        %33 = vector.multi_reduction <maximumf>, %31, %cst_18 [1] : vector<8x8xf32> to vector<8xf32>
        %34 = vector.shape_cast %33 : vector<8xf32> to vector<8x1xf32>
        %35 = arith.maximumf %32, %34 : vector<8x1xf32>
        %36 = arith.subf %32, %35 : vector<8x1xf32>
        %37 = math.exp %36 : vector<8x1xf32>
        %38 = vector.broadcast %35 : vector<8x1xf32> to vector<8x8xf32>
        %39 = arith.subf %31, %38 : vector<8x8xf32>
        %40 = math.exp %39 : vector<8x8xf32>
        %cst_19 = arith.constant dense<0.000000e+00> : vector<8xf32>
        %41 = vector.multi_reduction <add>, %40, %cst_19 [1] : vector<8x8xf32> to vector<8xf32>
        %42 = vector.shape_cast %41 : vector<8xf32> to vector<8x1xf32>
        %43 = arith.truncf %40 : vector<8x8xf32> to vector<8x8xbf16>
        %cst_20 = arith.constant dense<0.000000e+00> : vector<8x8xf32>
        %44 = tpu.matmul %43, %29, %cst_20 {dimension_numbers = #tpu.dot_dimension_numbers<[1], [0], [0], [1], [0, 0, 1, 1], [], []>} : vector<8x8xbf16>, vector<8x8xbf16>, vector<8x8xf32> -> vector<8x8xf32>
        %c0_21 = arith.constant 0 : index
        %c0_22 = arith.constant 0 : index
        %45 = vector.load %arg14[%c0_21, %c0_22] : memref<8x1xf32, #tpu.memory_space<vmem>>, vector<8x1xf32>
        %46 = arith.mulf %37, %45 : vector<8x1xf32>
        %47 = arith.addf %46, %42 : vector<8x1xf32>
        %c0_23 = arith.constant 0 : index
        %c0_24 = arith.constant 0 : index
        %48 = vector.load %arg14[%c0_23, %c0_24] : memref<8x1xf32, #tpu.memory_space<vmem>>, vector<8x1xf32>
        tpu.vector_store %arg14[%c0_23, %c0_24], %47 {strides = array<i32>} : memref<8x1xf32, #tpu.memory_space<vmem>>, vector<8x1xf32>,
        %c0_25 = arith.constant 0 : index
        %c0_26 = arith.constant 0 : index
        %49 = vector.load %arg15[%c0_25, %c0_26] : memref<8x8xf32, #tpu.memory_space<vmem>>, vector<8x8xf32>
        %50 = vector.broadcast %37 : vector<8x1xf32> to vector<8x8xf32>
        %51 = arith.mulf %50, %49 : vector<8x8xf32>
        %52 = arith.addf %51, %44 : vector<8x8xf32>
        %c0_27 = arith.constant 0 : index
        %c0_28 = arith.constant 0 : index
        %53 = vector.load %arg15[%c0_27, %c0_28] : memref<8x8xf32, #tpu.memory_space<vmem>>, vector<8x8xf32>
        tpu.vector_store %arg15[%c0_27, %c0_28], %52 {strides = array<i32>} : memref<8x8xf32, #tpu.memory_space<vmem>>, vector<8x8xf32>,
        %c0_29 = arith.constant 0 : index
        %c0_30 = arith.constant 0 : index
        %54 = vector.load %arg13[%c0_29, %c0_30] : memref<8x1xf32, #tpu.memory_space<vmem>>, vector<8x1xf32>
        tpu.vector_store %arg13[%c0_29, %c0_30], %35 {strides = array<i32>} : memref<8x1xf32, #tpu.memory_space<vmem>>, vector<8x1xf32>,
      } else {
      }
      %21 = arith.cmpi eq, %arg3, %arg1 : i32
      %22 = arith.extui %21 : i1 to i32
      %c0_i32_9 = arith.constant 0 : i32
      %23 = arith.cmpi ne, %22, %c0_i32_9 : i32
      scf.if %23 {
        %c0_10 = arith.constant 0 : index
        %c0_11 = arith.constant 0 : index
        %24 = vector.load %arg15[%c0_10, %c0_11] : memref<8x8xf32, #tpu.memory_space<vmem>>, vector<8x8xf32>
        %c0_12 = arith.constant 0 : index
        %c0_13 = arith.constant 0 : index
        %25 = vector.load %arg14[%c0_12, %c0_13] : memref<8x1xf32, #tpu.memory_space<vmem>>, vector<8x1xf32>
        %26 = vector.broadcast %25 : vector<8x1xf32> to vector<8x8xf32>
        %27 = arith.divf %24, %26 : vector<8x8xf32>
        %c0_14 = arith.constant 0 : index
        %c0_15 = arith.constant 0 : index
        %c0_16 = arith.constant 0 : index
        %28 = vector.load %arg11[%c0_14, %c0_15, %c0_16] : memref<1x8x32xf32, #tpu.memory_space<vmem>>, vector<1x8x32xf32>
        %29 = vector.shape_cast %28 : vector<1x8x32xf32> to vector<8x32xf32>
        %30 = arith.truncf %27 : vector<8x8xf32> to vector<8x8xbf16>
        %c0_17 = arith.constant 0 : index
        %c0_18 = arith.constant 0 : index
        %c0_19 = arith.constant 0 : index
        %31 = vector.load %arg8[%c0_17, %c0_18, %c0_19] : memref<1x8x32xbf16, #tpu.memory_space<vmem>>, vector<1x8x32xbf16>
        %32 = vector.shape_cast %31 : vector<1x8x32xbf16> to vector<8x32xbf16>
        %cst = arith.constant dense<0.000000e+00> : vector<8x32xf32>
        %33 = tpu.matmul %30, %32, %cst {dimension_numbers = #tpu.dot_dimension_numbers<[1], [0], [0], [1], [0, 0, 1, 1], [], []>} : vector<8x8xbf16>, vector<8x32xbf16>, vector<8x32xf32> -> vector<8x32xf32>
        %34 = arith.addf %29, %33 : vector<8x32xf32>
        %c0_20 = arith.constant 0 : index
        %c0_21 = arith.constant 0 : index
        %c0_22 = arith.constant 0 : index
        %35 = vector.load %arg11[%c0_20, %c0_21, %c0_22] : memref<1x8x32xf32, #tpu.memory_space<vmem>>, vector<1x8x32xf32>
        %36 = vector.shape_cast %35 : vector<1x8x32xf32> to vector<8x32xf32>
        %37 = vector.shape_cast %34 : vector<8x32xf32> to vector<1x8x32xf32>
        tpu.vector_store %arg11[%c0_20, %c0_21, %c0_22], %37 {strides = array<i32>} : memref<1x8x32xf32, #tpu.memory_space<vmem>>, vector<1x8x32xf32>,
      } else {
      }
    } else {
    }
    return
  }
  func.func @transform_0(%arg0: i32, %arg1: i32, %arg2: i32, %arg3: i32) -> (i32, i32, i32) {
    %c0_i32 = arith.constant 0 : i32
    %c0_i32_0 = arith.constant 0 : i32
    return %arg0, %arg1, %c0_i32 : i32, i32, i32
  }
  func.func @transform_1(%arg0: i32, %arg1: i32, %arg2: i32, %arg3: i32) -> (i32, i32, i32) {
    %c0_i32 = arith.constant 0 : i32
    %c0_i32_0 = arith.constant 0 : i32
    %c0_i32_1 = arith.constant 0 : i32
    return %arg2, %c0_i32, %c0_i32_0 : i32, i32, i32
  }
  func.func @transform_2(%arg0: i32, %arg1: i32, %arg2: i32, %arg3: i32) -> (i32, i32, i32) {
    %c0_i32 = arith.constant 0 : i32
    %c0_i32_0 = arith.constant 0 : i32
    %c0_i32_1 = arith.constant 0 : i32
    return %arg2, %c0_i32, %c0_i32_0 : i32, i32, i32
  }
  func.func @transform_3(%arg0: i32, %arg1: i32, %arg2: i32, %arg3: i32) -> (i32, i32, i32) {
    %c0_i32 = arith.constant 0 : i32
    %c0_i32_0 = arith.constant 0 : i32
    %c0_i32_1 = arith.constant 0 : i32
    return %arg2, %c0_i32, %c0_i32_0 : i32, i32, i32
  }
  func.func @transform_4(%arg0: i32, %arg1: i32, %arg2: i32, %arg3: i32) -> (i32, i32, i32) {
    %c0_i32 = arith.constant 0 : i32
    %c0_i32_0 = arith.constant 0 : i32
    %c0_i32_1 = arith.constant 0 : i32
    return %arg2, %c0_i32, %c0_i32_0 : i32, i32, i32
  }
  func.func @transform_5(%arg0: i32, %arg1: i32, %arg2: i32, %arg3: i32) -> (i32, i32) {
    %c0_i32 = arith.constant 0 : i32
    %c0_i32_0 = arith.constant 0 : i32
    return %arg1, %c0_i32 : i32, i32
  }
  func.func @transform_6(%arg0: i32, %arg1: i32, %arg2: i32, %arg3: i32) -> (i32, i32) {
    %c0_i32 = arith.constant 0 : i32
    %c0_i32_0 = arith.constant 0 : i32
    return %arg1, %c0_i32 : i32, i32
  }
  func.func @transform_7(%arg0: i32, %arg1: i32, %arg2: i32, %arg3: i32) -> (i32, i32, i32) {
    %c0_i32 = arith.constant 0 : i32
    %c0_i32_0 = arith.constant 0 : i32
    return %arg0, %arg1, %c0_i32 : i32, i32, i32
  }
}

</mosaic_0001>

<llo_original>
// kernel: tpu_custom_call.1
$region0: #{tpu_custom_call.1}
  #allocation0 [shape = 'u32[]', space=smem, size = 0x4, offset = 0x4, fixed_abs, tag = 'smem constant byte address 0x4 - core index']
  #allocation1 [shape = 'u32[144,128]{1,0:T(1,128)}', space=vmem, size = 0x12000, scoped, tag = 'internal scratch']
  #allocation2 [shape = 'bf16[8,8]{1,0:T(8,128)(2,1)}', space=vmem, size = 0x800, scoped, tag = 'scratch operand']
  #allocation3 [shape = 'f32[8,1]{1,0:T(8,128)}', space=vmem, size = 0x1000, scoped, tag = 'scratch operand']
  #allocation4 [shape = 'f32[8,1]{1,0:T(8,128)}', space=vmem, size = 0x1000, scoped, tag = 'scratch operand']
  #allocation5 [shape = 'f32[8,8]{1,0:T(8,128)}', space=vmem, size = 0x1000, scoped, tag = 'scratch operand']
  #allocation6 [shape = 'bf16[4,8,8]{2,1,0:T(8,128)(2,1)}', space=vmem, size = 0x2000, scoped, tag = 'scratch operand']
  #allocation7 [shape = 'bf16[4,8,8]{2,1,0:T(8,128)(2,1)}', space=vmem, size = 0x2000, scoped, tag = 'scratch operand']
  %s0 = inlined_call_operand.hbm [shape: bf16[2,8,32], index: 0, kind: input, shape index: {}]
  %s1 = inlined_call_operand.hbm [shape: bf16[4,32,8], index: 1, kind: input, shape index: {}]
  %s2 = inlined_call_operand.hbm [shape: bf16[4,32,8], index: 2, kind: input, shape index: {}]
  %s3 = inlined_call_operand.hbm [shape: bf16[4,32,8], index: 3, kind: input, shape index: {}]
  %s4 = inlined_call_operand.hbm [shape: bf16[4,8,32], index: 4, kind: input, shape index: {}]
  %s5 = inlined_call_operand.hbm [shape: f32[8,4], index: 5, kind: input, shape index: {}]
  %s6 = inlined_call_operand.hbm [shape: f32[8,4], index: 6, kind: input, shape index: {}]
  %s7 = inlined_call_operand.hbm [shape: f32[2,8,32], index: 7, kind: output, shape index: {}]
  %s8 = sld [smem:[#allocation0]]
  $region113: #{tpu_custom_call.1} parent=0
    _
  %s10 = ssub.s32 1, %s8
  %s11 = scalar_select 0, %s10, %s8
  $region1: #{tpu_custom_call.1} parent=0
    #allocation8 [shape = 'u8[4096]{0}', space=vmem, size = 0x1000, scoped, tag = 'input window, operand 0']
    #allocation9 [shape = 's32[2]{0}', space=sflag, size = 0x8, scoped, tag = 'scoped memory for tpu_custom_call.1']
    #allocation10 [shape = 's32[2]{0}', space=sflag, size = 0x8, scoped, tag = 'scoped memory for tpu_custom_call.1']
    #allocation11 [shape = 'u8[16384]{0}', space=vmem, size = 0x4000, scoped, tag = 'input window, operand 1']
    #allocation12 [shape = 's32[2]{0}', space=sflag, size = 0x8, scoped, tag = 'scoped memory for tpu_custom_call.1']
    #allocation13 [shape = 'u8[16384]{0}', space=vmem, size = 0x4000, scoped, tag = 'input window, operand 2']
    #allocation14 [shape = 'u8[16384]{0}', space=vmem, size = 0x4000, scoped, tag = 'input window, operand 3']
    #allocation15 [shape = 's32[2]{0}', space=sflag, size = 0x8, scoped, tag = 'scoped memory for tpu_custom_call.1']
    #allocation16 [shape = 'u8[4096]{0}', space=vmem, size = 0x1000, scoped, tag = 'input window, operand 4']
    #allocation17 [shape = 'u8[4096]{0}', space=vmem, size = 0x1000, scoped, tag = 'input window, operand 5, single buffered']
    #allocation18 [shape = 's32[1]{0}', space=sflag, size = 0x4, scoped, tag = 'scoped memory for tpu_custom_call.1']
    #allocation19 [shape = 'u8[4096]{0}', space=vmem, size = 0x1000, scoped, tag = 'input window, operand 6, single buffered']
    #allocation20 [shape = 'u8[8192]{0}', space=vmem, size = 0x2000, scoped, tag = 'output window, operand 0']
    %12 = vsyncpa [#allocation9], 0
    %s13 = scalar_lea.sflag [#allocation9], 1
    %14 = vsyncpa %s13, 0
    %15 = vsyncpa [#allocation12], 0
    %s16 = scalar_lea.sflag [#allocation12], 1
    %17 = vsyncpa %s16, 0
    %18 = vsyncpa [#allocation15], 0
    %s19 = scalar_lea.sflag [#allocation15], 1
    %20 = vsyncpa %s19, 0
    %21 = vsyncpa [#allocation18], 0
    %22 = vsyncpa [#allocation10], 0
    %s23 = scalar_lea.sflag [#allocation10], 1
    %24 = vsyncpa %s23, 0
    loop: start=0, step=1, limit=10
    $region2: #{tpu_custom_call.1} parent=1 // loop_pre_header
      _
    $region3: #{tpu_custom_call.1} parent=1 // loop_header
      %s26 = sphi 0, %s30
      %p27 = scmp.ge.s32.totalorder %s26, 10
      %s33 = sphi 0, %s59
      %s34 = sphi 0, %s55
      %s35 = sphi 0, %s51
      %s36 = sphi 0, %s47
      %s37 = sphi 0, %s33
      %s38 = sphi 0, %s34
      %s39 = sphi 0, %s35
      %s40 = sphi 0, %s36
      %s41 = sphi 0, %s37
      %s42 = sphi 0, %s38
      %s43 = sphi 0, %s39
      %s44 = sphi 0, %s40
      %s64 = sphi 0, %s66
      %s67 = sphi 0, %s64
      %s68 = sphi 0, %s67
      %s84 = sphi 0, %s68
      %s90 = sphi 0, %s92
      %s93 = sphi 0, %s90
      %s94 = sphi 0, %s93
      %s110 = sphi 0, %s94
      %s116 = sphi 0, %s118
      %s119 = sphi 0, %s116
      %s120 = sphi 0, %s119
      %s136 = sphi 0, %s120
      %s142 = sphi 0, %s144
      %s145 = sphi 0, %s142
      %s146 = sphi 0, %s145
      %s162 = sphi 0, %s146
      %s168 = sphi 0, %s170
      %s171 = sphi 0, %s168
      %s172 = sphi 0, %s171
      %s188 = sphi 0, %s172
      %s194 = sphi 0, %s196
      %s197 = sphi 0, %s194
      %s198 = sphi 0, %s197
      %s214 = sphi 0, %s198
      %s220 = sphi 0, %s222
      %s223 = sphi 0, %s220
      %s224 = sphi 0, %s223
      %s240 = sphi 0, %s224
      %s248 = sphi 0, %s250
      %s251 = sphi 0, %s248
      %s252 = sphi 0, %s251
      %s268 = sphi 0, %s252
    $region4: #{tpu_custom_call.1} parent=1 // loop_header_branch
      %29 = sbr.rel (%p27) target = $region8
    $region5: #{tpu_custom_call.1} parent=1 // loop_body
      %s31 = ssub.s32 %s26, 1
      %s32 = ssub.s32 %s26, 2
      %s45 = sadd.s32 1, %s36
      %p46 = scmp.ge.s32.totalorder %s45, 1
      %s47 = scalar_select %p46, 0, %s45
      %s48 = sadd.s32 1, %s35
      %s49 = scalar_select %p46, %s48, %s35
      %p50 = scmp.ge.s32.totalorder %s49, 4
      %s51 = scalar_select %p50, 0, %s49
      %s52 = sadd.s32 1, %s34
      %s53 = scalar_select %p50, %s52, %s34
      %p54 = scmp.ge.s32.totalorder %s53, 1
      %s55 = scalar_select %p54, 0, %s53
      %s56 = sadd.s32 1, %s33
      %s57 = scalar_select %p54, %s56, %s33
      %p58 = scmp.ge.s32.totalorder %s57, 2
      %s59 = scalar_select %p58, 0, %s57
      %s60 = ssub.s32 %s33, %s59
      %s61 = ssub.s32 %s34, %s55
      %s62 = sor.u32 %s60, %s61
      %p63 = scmp.eq.s32.totalorder %s62, 0
      %s65 = sadd.s32 %s64, 1
      %s66 = scalar_select %p63, %s64, %s65
      %p69 = pneg %p63
      %p70 = scmp.eq.s32.totalorder %s26, 7
      %p71 = por %p69, %p70
      %p72 = scmp.ne.s32.totalorder %s64, %s67
      %p73 = scmp.eq.s32.totalorder %s26, 0
      %p74 = por %p72, %p73
      %p75 = scmp.ne.s32.totalorder %s64, %s67
      %p76 = scmp.eq.s32.totalorder %s31, 7
      %p77 = por %p75, %p76
      %p78 = scmp.ne.s32.totalorder %s67, %s68
      %p79 = scmp.eq.s32.totalorder %s31, 0
      %p80 = por %p78, %p79
      %p81 = scmp.ne.s32.totalorder %s67, %s68
      %p82 = scmp.eq.s32.totalorder %s32, 7
      %p83 = por %p81, %p82
      %p85 = scmp.ne.s32.totalorder %s68, %s84
      %p86 = scmp.eq.s32.totalorder %s32, 0
      %p87 = por %p85, %p86
      %s88 = ssub.s32 %s35, %s51
      %p89 = scmp.eq.s32.totalorder %s88, 0
      %s91 = sadd.s32 %s90, 1
      %s92 = scalar_select %p89, %s90, %s91
      %p95 = pneg %p89
      %p96 = scmp.eq.s32.totalorder %s26, 7
      %p97 = por %p95, %p96
      %p98 = scmp.ne.s32.totalorder %s90, %s93
      %p99 = scmp.eq.s32.totalorder %s26, 0
      %p100 = por %p98, %p99
      %p101 = scmp.ne.s32.totalorder %s90, %s93
      %p102 = scmp.eq.s32.totalorder %s31, 7
      %p103 = por %p101, %p102
      %p104 = scmp.ne.s32.totalorder %s93, %s94
      %p105 = scmp.eq.s32.totalorder %s31, 0
      %p106 = por %p104, %p105
      %p107 = scmp.ne.s32.totalorder %s93, %s94
      %p108 = scmp.eq.s32.totalorder %s32, 7
      %p109 = por %p107, %p108
      %p111 = scmp.ne.s32.totalorder %s94, %s110
      %p112 = scmp.eq.s32.totalorder %s32, 0
      %p113 = por %p111, %p112
      %s114 = ssub.s32 %s35, %s51
      %p115 = scmp.eq.s32.totalorder %s114, 0
      %s117 = sadd.s32 %s116, 1
      %s118 = scalar_select %p115, %s116, %s117
      %p121 = pneg %p115
      %p122 = scmp.eq.s32.totalorder %s26, 7
      %p123 = por %p121, %p122
      %p124 = scmp.ne.s32.totalorder %s116, %s119
      %p125 = scmp.eq.s32.totalorder %s26, 0
      %p126 = por %p124, %p125
      %p127 = scmp.ne.s32.totalorder %s116, %s119
      %p128 = scmp.eq.s32.totalorder %s31, 7
      %p129 = por %p127, %p128
      %p130 = scmp.ne.s32.totalorder %s119, %s120
      %p131 = scmp.eq.s32.totalorder %s31, 0
      %p132 = por %p130, %p131
      %p133 = scmp.ne.s32.totalorder %s119, %s120
      %p134 = scmp.eq.s32.totalorder %s32, 7
      %p135 = por %p133, %p134
      %p137 = scmp.ne.s32.totalorder %s120, %s136
      %p138 = scmp.eq.s32.totalorder %s32, 0
      %p139 = por %p137, %p138
      %s140 = ssub.s32 %s35, %s51
      %p141 = scmp.eq.s32.totalorder %s140, 0
      %s143 = sadd.s32 %s142, 1
      %s144 = scalar_select %p141, %s142, %s143
      %p147 = pneg %p141
      %p148 = scmp.eq.s32.totalorder %s26, 7
      %p149 = por %p147, %p148
      %p150 = scmp.ne.s32.totalorder %s142, %s145
      %p151 = scmp.eq.s32.totalorder %s26, 0
      %p152 = por %p150, %p151
      %p153 = scmp.ne.s32.totalorder %s142, %s145
      %p154 = scmp.eq.s32.totalorder %s31, 7
      %p155 = por %p153, %p154
      %p156 = scmp.ne.s32.totalorder %s145, %s146
      %p157 = scmp.eq.s32.totalorder %s31, 0
      %p158 = por %p156, %p157
      %p159 = scmp.ne.s32.totalorder %s145, %s146
      %p160 = scmp.eq.s32.totalorder %s32, 7
      %p161 = por %p159, %p160
      %p163 = scmp.ne.s32.totalorder %s146, %s162
      %p164 = scmp.eq.s32.totalorder %s32, 0
      %p165 = por %p163, %p164
      %s166 = ssub.s32 %s35, %s51
      %p167 = scmp.eq.s32.totalorder %s166, 0
      %s169 = sadd.s32 %s168, 1
      %s170 = scalar_select %p167, %s168, %s169
      %p173 = pneg %p167
      %p174 = scmp.eq.s32.totalorder %s26, 7
      %p175 = por %p173, %p174
      %p176 = scmp.ne.s32.totalorder %s168, %s171
      %p177 = scmp.eq.s32.totalorder %s26, 0
      %p178 = por %p176, %p177
      %p179 = scmp.ne.s32.totalorder %s168, %s171
      %p180 = scmp.eq.s32.totalorder %s31, 7
      %p181 = por %p179, %p180
      %p182 = scmp.ne.s32.totalorder %s171, %s172
      %p183 = scmp.eq.s32.totalorder %s31, 0
      %p184 = por %p182, %p183
      %p185 = scmp.ne.s32.totalorder %s171, %s172
      %p186 = scmp.eq.s32.totalorder %s32, 7
      %p187 = por %p185, %p186
      %p189 = scmp.ne.s32.totalorder %s172, %s188
      %p190 = scmp.eq.s32.totalorder %s32, 0
      %p191 = por %p189, %p190
      %s192 = ssub.s32 %s34, %s55
      %p193 = scmp.eq.s32.totalorder %s192, 0
      %s195 = sadd.s32 %s194, 1
      %s196 = scalar_select %p193, %s194, %s195
      %p199 = pneg %p193
      %p200 = scmp.eq.s32.totalorder %s26, 7
      %p201 = por %p199, %p200
      %p202 = scmp.ne.s32.totalorder %s194, %s197
      %p203 = scmp.eq.s32.totalorder %s26, 0
      %p204 = por %p202, %p203
      %p205 = scmp.ne.s32.totalorder %s194, %s197
      %p206 = scmp.eq.s32.totalorder %s31, 7
      %p207 = por %p205, %p206
      %p208 = scmp.ne.s32.totalorder %s197, %s198
      %p209 = scmp.eq.s32.totalorder %s31, 0
      %p210 = por %p208, %p209
      %p211 = scmp.ne.s32.totalorder %s197, %s198
      %p212 = scmp.eq.s32.totalorder %s32, 7
      %p213 = por %p211, %p212
      %p215 = scmp.ne.s32.totalorder %s198, %s214
      %p216 = scmp.eq.s32.totalorder %s32, 0
      %p217 = por %p215, %p216
      %s218 = ssub.s32 %s34, %s55
      %p219 = scmp.eq.s32.totalorder %s218, 0
      %s221 = sadd.s32 %s220, 1
      %s222 = scalar_select %p219, %s220, %s221
      %p225 = pneg %p219
      %p226 = scmp.eq.s32.totalorder %s26, 7
      %p227 = por %p225, %p226
      %p228 = scmp.ne.s32.totalorder %s220, %s223
      %p229 = scmp.eq.s32.totalorder %s26, 0
      %p230 = por %p228, %p229
      %p231 = scmp.ne.s32.totalorder %s220, %s223
      %p232 = scmp.eq.s32.totalorder %s31, 7
      %p233 = por %p231, %p232
      %p234 = scmp.ne.s32.totalorder %s223, %s224
      %p235 = scmp.eq.s32.totalorder %s31, 0
      %p236 = por %p234, %p235
      %p237 = scmp.ne.s32.totalorder %s223, %s224
      %p238 = scmp.eq.s32.totalorder %s32, 7
      %p239 = por %p237, %p238
      %p241 = scmp.ne.s32.totalorder %s224, %s240
      %p242 = scmp.eq.s32.totalorder %s32, 0
      %p243 = por %p241, %p242
      %s244 = ssub.s32 %s33, %s59
      %s245 = ssub.s32 %s34, %s55
      %s246 = sor.u32 %s244, %s245
      %p247 = scmp.eq.s32.totalorder %s246, 0
      %s249 = sadd.s32 %s248, 1
      %s250 = scalar_select %p247, %s248, %s249
      %p253 = pneg %p247
      %p254 = scmp.eq.s32.totalorder %s26, 7
      %p255 = por %p253, %p254
      %p256 = scmp.ne.s32.totalorder %s248, %s251
      %p257 = scmp.eq.s32.totalorder %s26, 0
      %p258 = por %p256, %p257
      %p259 = scmp.ne.s32.totalorder %s248, %s251
      %p260 = scmp.eq.s32.totalorder %s31, 7
      %p261 = por %p259, %p260
      %p262 = scmp.ne.s32.totalorder %s251, %s252
      %p263 = scmp.eq.s32.totalorder %s31, 0
      %p264 = por %p262, %p263
      %p265 = scmp.ne.s32.totalorder %s251, %s252
      %p266 = scmp.eq.s32.totalorder %s32, 7
      %p267 = por %p265, %p266
      %p269 = scmp.ne.s32.totalorder %s252, %s268
      %p270 = scmp.eq.s32.totalorder %s32, 0
      %p271 = por %p269, %p270
      %p272 = scmp.le.s32.totalorder 1, %s26
      %p273 = scmp.lt.s32.totalorder %s26, 9
      %p274 = pnand %p272, %p273
      %p275 = pneg %p274
      // Predicated region
      $region9: #{tpu_custom_call.1} parent=5 // pred_check
        _
      $region10: #{tpu_custom_call.1} parent=5 // pred_check_branch
        %277 = sbr.rel (%p274) target = $region12
      $region11: #{tpu_custom_call.1} parent=5 // pred_region
        %s278 = ssub.s32 %s26, 1
        // Predicated region
        $region13: #{tpu_custom_call.1} parent=11 // pred_check
          %p279 = pneg %p210
        $region14: #{tpu_custom_call.1} parent=11 // pred_check_branch
          %281 = sbr.rel (%p279) target = $region16
        $region15: #{tpu_custom_call.1} parent=11 // pred_region
          %s283 = ssub.s32 128, 128
          %284 = vsyncadd [#allocation18], %s283
          %s285 = smul.addr %s38, 128
          %s286 = scalar_lea.hbm %s5, %s285
          %s288 = sshll.u32 [#allocation17], 4
          %s289 = int_to_ptr.vmem [resolvable:$true] %s288
          %291 = dma.hbm_to_vmem [thread:$0]  %s286, 128, %s289, [#allocation18]
        $region16: #{tpu_custom_call.1} parent=11 // pred_fallthru
          _
        // Predicated region
        $region17: #{tpu_custom_call.1} parent=11 // pred_check
          %p292 = pneg %p236
        $region18: #{tpu_custom_call.1} parent=11 // pred_check_branch
          %294 = sbr.rel (%p292) target = $region20
        $region19: #{tpu_custom_call.1} parent=11 // pred_region
          %s296 = ssub.s32 128, 128
          %297 = vsyncadd [#allocation18], %s296
          %s298 = smul.addr %s38, 128
          %s299 = scalar_lea.hbm %s6, %s298
          %s301 = sshll.u32 [#allocation19], 4
          %s302 = int_to_ptr.vmem [resolvable:$true] %s301
          %304 = dma.hbm_to_vmem [thread:$0]  %s299, 128, %s302, [#allocation18]
        $region20: #{tpu_custom_call.1} parent=11 // pred_fallthru
          _
      $region12: #{tpu_custom_call.1} parent=5 // pred_fallthru
        _
      %p305 = scmp.lt.s32.totalorder %s26, 8
      // Predicated region
      $region21: #{tpu_custom_call.1} parent=5 // pred_check
        %p306 = pneg %p305
      $region22: #{tpu_custom_call.1} parent=5 // pred_check_branch
        %308 = sbr.rel (%p306) target = $region24
      $region23: #{tpu_custom_call.1} parent=5 // pred_region
        // Predicated region
        $region25: #{tpu_custom_call.1} parent=23 // pred_check
          %p309 = pneg %p74
        $region26: #{tpu_custom_call.1} parent=23 // pred_check_branch
          %311 = sbr.rel (%p309) target = $region28
        $region27: #{tpu_custom_call.1} parent=23 // pred_region
          %s312 = sand.u32 %s64, 1
          %s313 = scalar_lea.sflag [#allocation9], %s312
          %s314 = sand.u32 %s64, 1
          %s315 = smul.addr %s314, 4
          %s316 = scalar_lea.vmem [#allocation8], %s315
          %s318 = ssub.s32 64, 64
          %319 = vsyncadd %s313, %s318
          %s320 = sadd.s32 %s34, %s33
          %s321 = smul.addr %s320, 64
          %s322 = scalar_lea.hbm %s0, %s321
          %s324 = sshll.u32 %s316, 4
          %s325 = int_to_ptr.vmem [resolvable:$true] %s324
          %327 = dma.hbm_to_vmem [thread:$0]  %s322, 64, %s325, %s313
        $region28: #{tpu_custom_call.1} parent=23 // pred_fallthru
          _
        // Predicated region
        $region29: #{tpu_custom_call.1} parent=23 // pred_check
          %p328 = pneg %p100
        $region30: #{tpu_custom_call.1} parent=23 // pred_check_branch
          %330 = sbr.rel (%p328) target = $region32
        $region31: #{tpu_custom_call.1} parent=23 // pred_region
          %s331 = sand.u32 %s26, 1
          %s332 = scalar_lea.sflag [#allocation12], %s331
          %s333 = sand.u32 %s90, 1
          %s334 = smul.addr %s333, 16
          %s335 = scalar_lea.vmem [#allocation11], %s334
          %s337 = ssub.s32 256, 256
          %338 = vsyncadd %s332, %s337
          %s339 = smul.addr %s35, 4
          %s340 = smul.addr %s339, 64
          %s341 = scalar_lea.hbm %s1, %s340
          %s342 = sshll.u32 %s335, 4
          %s343 = int_to_ptr.vmem [resolvable:$true] %s342
          %348 = dma.hbm_to_vmem [thread:$0]  %s341, 256, %s343, %s332, 64, 64, 4
        $region32: #{tpu_custom_call.1} parent=23 // pred_fallthru
          _
        // Predicated region
        $region33: #{tpu_custom_call.1} parent=23 // pred_check
          %p349 = pneg %p126
        $region34: #{tpu_custom_call.1} parent=23 // pred_check_branch
          %351 = sbr.rel (%p349) target = $region36
        $region35: #{tpu_custom_call.1} parent=23 // pred_region
          %s352 = sand.u32 %s26, 1
          %s353 = scalar_lea.sflag [#allocation12], %s352
          %s354 = sand.u32 %s116, 1
          %s355 = smul.addr %s354, 16
          %s356 = scalar_lea.vmem [#allocation13], %s355
          %s358 = ssub.s32 256, 256
          %359 = vsyncadd %s353, %s358
          %s360 = smul.addr %s35, 4
          %s361 = smul.addr %s360, 64
          %s362 = scalar_lea.hbm %s2, %s361
          %s363 = sshll.u32 %s356, 4
          %s364 = int_to_ptr.vmem [resolvable:$true] %s363
          %369 = dma.hbm_to_vmem [thread:$0]  %s362, 256, %s364, %s353, 64, 64, 4
        $region36: #{tpu_custom_call.1} parent=23 // pred_fallthru
          _
        // Predicated region
        $region37: #{tpu_custom_call.1} parent=23 // pred_check
          %p370 = pneg %p152
        $region38: #{tpu_custom_call.1} parent=23 // pred_check_branch
          %372 = sbr.rel (%p370) target = $region40
        $region39: #{tpu_custom_call.1} parent=23 // pred_region
          %s373 = sand.u32 %s26, 1
          %s374 = scalar_lea.sflag [#allocation15], %s373
          %s375 = sand.u32 %s142, 1
          %s376 = smul.addr %s375, 16
          %s377 = scalar_lea.vmem [#allocation14], %s376
          %s379 = ssub.s32 256, 256
          %380 = vsyncadd %s374, %s379
          %s381 = smul.addr %s35, 4
          %s382 = smul.addr %s381, 64
          %s383 = scalar_lea.hbm %s3, %s382
          %s384 = sshll.u32 %s377, 4
          %s385 = int_to_ptr.vmem [resolvable:$true] %s384
          %390 = dma.hbm_to_vmem [thread:$0]  %s383, 256, %s385, %s374, 64, 64, 4
        $region40: #{tpu_custom_call.1} parent=23 // pred_fallthru
          _
        // Predicated region
        $region41: #{tpu_custom_call.1} parent=23 // pred_check
          %p391 = pneg %p178
        $region42: #{tpu_custom_call.1} parent=23 // pred_check_branch
          %393 = sbr.rel (%p391) target = $region44
        $region43: #{tpu_custom_call.1} parent=23 // pred_region
          %s394 = sand.u32 %s26, 1
          %s395 = scalar_lea.sflag [#allocation15], %s394
          %s396 = sand.u32 %s168, 1
          %s397 = smul.addr %s396, 4
          %s398 = scalar_lea.vmem [#allocation16], %s397
          %s400 = ssub.s32 64, 64
          %401 = vsyncadd %s395, %s400
          %s402 = smul.addr %s35, 64
          %s403 = scalar_lea.hbm %s4, %s402
          %s405 = sshll.u32 %s398, 4
          %s406 = int_to_ptr.vmem [resolvable:$true] %s405
          %408 = dma.hbm_to_vmem [thread:$0]  %s403, 64, %s406, %s395
        $region44: #{tpu_custom_call.1} parent=23 // pred_fallthru
          _
      $region24: #{tpu_custom_call.1} parent=5 // pred_fallthru
        _
      %p409 = scmp.le.s32.totalorder 1, %s26
      %p410 = scmp.lt.s32.totalorder %s26, 9
      %p411 = pnand %p409, %p410
      %p412 = pneg %p411
      // Predicated region
      $region45: #{tpu_custom_call.1} parent=5 // pred_check
        _
      $region46: #{tpu_custom_call.1} parent=5 // pred_check_branch
        %414 = sbr.rel (%p411) target = $region48
      $region47: #{tpu_custom_call.1} parent=5 // pred_region
        %s415 = ssub.s32 %s26, 1
        %s416 = sand.u32 %s67, 1
        %s417 = scalar_lea.sflag [#allocation9], %s416
        %s418 = sand.u32 %s67, 1
        %s419 = smul.addr %s418, 4
        %s420 = scalar_lea.vmem [#allocation8], %s419
        // Predicated region
        $region49: #{tpu_custom_call.1} parent=47 // pred_check
          %p421 = pneg %p80
        $region50: #{tpu_custom_call.1} parent=47 // pred_check_branch
          %423 = sbr.rel (%p421) target = $region52
        $region51: #{tpu_custom_call.1} parent=47 // pred_region
          %424 = dma.done %s417, 64
        $region52: #{tpu_custom_call.1} parent=47 // pred_fallthru
          _
        %s425 = sand.u32 %s31, 1
        %s426 = scalar_lea.sflag [#allocation12], %s425
        %s427 = sand.u32 %s93, 1
        %s428 = smul.addr %s427, 16
        %s429 = scalar_lea.vmem [#allocation11], %s428
        // Predicated region
        $region53: #{tpu_custom_call.1} parent=47 // pred_check
          %p430 = pneg %p106
        $region54: #{tpu_custom_call.1} parent=47 // pred_check_branch
          %432 = sbr.rel (%p430) target = $region56
        $region55: #{tpu_custom_call.1} parent=47 // pred_region
          %433 = dma.done %s426, 256
        $region56: #{tpu_custom_call.1} parent=47 // pred_fallthru
          _
        %s434 = sand.u32 %s31, 1
        %s435 = scalar_lea.sflag [#allocation12], %s434
        %s436 = sand.u32 %s119, 1
        %s437 = smul.addr %s436, 16
        %s438 = scalar_lea.vmem [#allocation13], %s437
        // Predicated region
        $region57: #{tpu_custom_call.1} parent=47 // pred_check
          %p439 = pneg %p132
        $region58: #{tpu_custom_call.1} parent=47 // pred_check_branch
          %441 = sbr.rel (%p439) target = $region60
        $region59: #{tpu_custom_call.1} parent=47 // pred_region
          %442 = dma.done %s435, 256
        $region60: #{tpu_custom_call.1} parent=47 // pred_fallthru
          _
        %s443 = sand.u32 %s31, 1
        %s444 = scalar_lea.sflag [#allocation15], %s443
        %s445 = sand.u32 %s145, 1
        %s446 = smul.addr %s445, 16
        %s447 = scalar_lea.vmem [#allocation14], %s446
        // Predicated region
        $region61: #{tpu_custom_call.1} parent=47 // pred_check
          %p448 = pneg %p158
        $region62: #{tpu_custom_call.1} parent=47 // pred_check_branch
          %450 = sbr.rel (%p448) target = $region64
        $region63: #{tpu_custom_call.1} parent=47 // pred_region
          %451 = dma.done %s444, 256
        $region64: #{tpu_custom_call.1} parent=47 // pred_fallthru
          _
        %s452 = sand.u32 %s31, 1
        %s453 = scalar_lea.sflag [#allocation15], %s452
        %s454 = sand.u32 %s171, 1
        %s455 = smul.addr %s454, 4
        %s456 = scalar_lea.vmem [#allocation16], %s455
        // Predicated region
        $region65: #{tpu_custom_call.1} parent=47 // pred_check
          %p457 = pneg %p184
        $region66: #{tpu_custom_call.1} parent=47 // pred_check_branch
          %459 = sbr.rel (%p457) target = $region68
        $region67: #{tpu_custom_call.1} parent=47 // pred_region
          %460 = dma.done %s453, 64
        $region68: #{tpu_custom_call.1} parent=47 // pred_fallthru
          _
        // Predicated region
        $region69: #{tpu_custom_call.1} parent=47 // pred_check
          %p461 = pneg %p210
        $region70: #{tpu_custom_call.1} parent=47 // pred_check_branch
          %463 = sbr.rel (%p461) target = $region72
        $region71: #{tpu_custom_call.1} parent=47 // pred_region
          %464 = dma.done [#allocation18], 128
        $region72: #{tpu_custom_call.1} parent=47 // pred_fallthru
          _
        // Predicated region
        $region73: #{tpu_custom_call.1} parent=47 // pred_check
          %p465 = pneg %p236
        $region74: #{tpu_custom_call.1} parent=47 // pred_check_branch
          %467 = sbr.rel (%p465) target = $region76
        $region75: #{tpu_custom_call.1} parent=47 // pred_region
          %468 = dma.done [#allocation18], 128
        $region76: #{tpu_custom_call.1} parent=47 // pred_fallthru
          _
        %s469 = sand.u32 %s67, 1
        %s470 = scalar_lea.sflag [#allocation9], %s469
        %s471 = sand.u32 %s67, 1
        %s472 = smul.addr %s471, 4
        %s473 = scalar_lea.vmem [#allocation8], %s472
        %p474 = pneg %p80
        %p475 = pneg %p77
        %s476 = sand.u32 %s31, 1
        %s477 = scalar_lea.sflag [#allocation12], %s476
        %s478 = sand.u32 %s93, 1
        %s479 = smul.addr %s478, 16
        %s480 = scalar_lea.vmem [#allocation11], %s479
        %p481 = pneg %p106
        %p482 = pneg %p103
        %s483 = sand.u32 %s31, 1
        %s484 = scalar_lea.sflag [#allocation12], %s483
        %s485 = sand.u32 %s119, 1
        %s486 = smul.addr %s485, 16
        %s487 = scalar_lea.vmem [#allocation13], %s486
        %p488 = pneg %p132
        %p489 = pneg %p129
        %s490 = sand.u32 %s31, 1
        %s491 = scalar_lea.sflag [#allocation15], %s490
        %s492 = sand.u32 %s145, 1
        %s493 = smul.addr %s492, 16
        %s494 = scalar_lea.vmem [#allocation14], %s493
        %p495 = pneg %p158
        %p496 = pneg %p155
        %s497 = sand.u32 %s31, 1
        %s498 = scalar_lea.sflag [#allocation15], %s497
        %s499 = sand.u32 %s171, 1
        %s500 = smul.addr %s499, 4
        %s501 = scalar_lea.vmem [#allocation16], %s500
        %p502 = pneg %p184
        %p503 = pneg %p181
        %p504 = pneg %p210
        %p505 = pneg %p207
        %p506 = pneg %p236
        %p507 = pneg %p233
        %p508 = pneg %p264
        %p509 = pneg %p261
        %s510 = sand.u32 %s251, 1
        %s511 = scalar_lea.sflag [#allocation10], %s510
        %s512 = sand.u32 %s251, 1
        %s513 = smul.addr %s512, 8
        %s514 = scalar_lea.vmem [#allocation20], %s513
        %s516 = sadd.s32 %s39, %s40
        %p517 = scmp.eq.s32.totalorder %s39, 0
        %p518 = scmp.eq.s32.totalorder %s40, 0
        %p519 = pnand %p517, %p518
        %p520 = pneg %p519
        // Predicated region
        $region77: #{tpu_custom_call.1} parent=47 // pred_check
          _
        $region78: #{tpu_custom_call.1} parent=47 // pred_check_branch
          %522 = sbr.rel (%p519) target = $region80
        $region79: #{tpu_custom_call.1} parent=47 // pred_region
          %vm523 = vcmask 261120
          %524 = vst.msk [vmem:[%s514] sm:$0xff] %vm523, 0.0
        $region80: #{tpu_custom_call.1} parent=47 // pred_fallthru
          _
        %p525 = scmp.le.s32.totalorder %s40, %s38
        // Predicated region
        $region81: #{tpu_custom_call.1} parent=47 // pred_check
          %p526 = pneg %p525
        $region82: #{tpu_custom_call.1} parent=47 // pred_check_branch
          %528 = sbr.rel (%p526) target = $region84
        $region83: #{tpu_custom_call.1} parent=47 // pred_region
          %v529 = vld [vmem:[%s420] sm:$0xf]
          // Predicated region
          $region85: #{tpu_custom_call.1} parent=83 // pred_check
            %p530 = pneg %p518
          $region86: #{tpu_custom_call.1} parent=83 // pred_check_branch
            %532 = sbr.rel (%p530) target = $region88
          $region87: #{tpu_custom_call.1} parent=83 // pred_region
            %v533 = vld [vmem:[%s429] sm:$0xf]
            %v534 = vld [vmem:[%s429 + $0x4] sm:$0xf]
            %v535 = vld [vmem:[%s429 + $0x8] sm:$0xf]
            %v536 = vld [vmem:[%s429 + $0xc] sm:$0xf]
            %v541 = vunpack.c.l.b16 %v533
            %v542 = vunpack.c.l.b16 %v534
            %v543 = vunpack.c.l.b16 %v535
            %v544 = vunpack.c.l.b16 %v536
            %v545 = vpack.c.b16 %v542, %v541
            %v546 = vpack.c.b16 %v544, %v543
            %vm549 = vcmask 261120
            %v551 = vsel %vm549, %v529, 0
            %553 = vmatprep.subr.bf16.mxu0 0
            %554 = vmatpush1.bf16.msra.mxu0 %v545
            %555 = vmatprep.subr.bf16.mxu0 0
            %556 = vmatpush1.bf16.msra.mxu0 %v546
            %557 = vmatprep.subr.bf16.mxu0 0
            %558 = vmatpush1.bf16.msra.mxu0 0
            %559 = vmatprep.subr.bf16.mxu0 0
            %560 = vmatpush1.bf16.msra.mxu0 0
            %561 = vmatprep.subr.bf16.mxu0 0
            %562 = vmatpush1.bf16.msra.mxu0 0
            %563 = vmatprep.subr.bf16.mxu0 0
            %564 = vmatpush1.bf16.msra.mxu0 0
            %565 = vmatprep.subr.bf16.mxu0 0
            %566 = vmatpush1.bf16.msra.mxu0 0
            %567 = vmatprep.subr.bf16.mxu0 0
            %568 = vmatpush1.bf16.msra.mxu0 0
            %569 = vmatprep.subr.bf16.mxu0 0
            %570 = vmatpush1.bf16.msra.mxu0 0
            %571 = vmatprep.subr.bf16.mxu0 0
            %572 = vmatpush1.bf16.msra.mxu0 0
            %573 = vmatprep.subr.bf16.mxu0 0
            %574 = vmatpush1.bf16.msra.mxu0 0
            %575 = vmatprep.subr.bf16.mxu0 0
            %576 = vmatpush1.bf16.msra.mxu0 0
            %577 = vmatprep.subr.bf16.mxu0 0
            %578 = vmatpush1.bf16.msra.mxu0 0
            %579 = vmatprep.subr.bf16.mxu0 0
            %580 = vmatpush1.bf16.msra.mxu0 0
            %581 = vmatprep.subr.bf16.mxu0 0
            %582 = vmatpush1.bf16.msra.mxu0 0
            %583 = vmatprep.subr.bf16.mxu0 0
            %584 = vmatpush1.bf16.msra.mxu0 0
            %585 = vmatprep.mubr.bf16.mxu0 0
            %586 = vmatmul.mubr.bf16.gmra.mrb[0].mxu0 %v551
            %v587 = vpop.f32.mrb[0].mxu0
            %v588 = vadd.f32 0.0, %v587
            %v589 = vpop.f32.mrb[0].mxu0
            %v590 = vpop.f32.mrb[0].mxu0
            %v591 = vpop.f32.mrb[0].mxu0
            %592 = vdwg.mxu0
            %v593 = vld [vmem:[#allocation17] sm:$0xff]
            %v594 = vld [vmem:[#allocation19] sm:$0xff]
            %v595 = vmul.f32 %v588, %v593
            %597 = vrot.lane.b32.xlu0 %v594, 4
            %v598 = vpop.permute.xlu0 %597
            %v600 = vmul.f32 %v588, %v598
            %602 = vrot.lane.b32.xlu0 %v600, 124
            %v603 = vpop.permute.xlu0 %602
            %v605 = vadd.f32 %v595, %v603
            %607 = vrot.lane.b32.xlu0 %v593, 4
            %v608 = vpop.permute.xlu0 %607
            %v610 = vmul.f32 %v588, %v608
            %v611 = vmul.f32 %v588, %v594
            %613 = vrot.lane.b32.xlu0 %v611, 4
            %v614 = vpop.permute.xlu0 %613
            %v616 = vsub.f32 %v610, %v614
            %vm617 = vcmask 31744
            %v618 = vsel %vm617, %v605, %v616
            %v619 = vmul.f32 %v618, 0.35355338
            %v620 = vpack.c.bf16 %v619, %v619
            %vm621 = vcmask 60416
            %622 = vst.msk [vmem:[#allocation2] sm:$0xf] %vm621, %v620
            %vm623 = vcmask 7168
            %624 = vst.msk [vmem:[#allocation3] sm:$0xff] %vm623, -1e+30
            %625 = vst.msk [vmem:[#allocation4] sm:$0xff] %vm623, 0.0
            %vm626 = vcmask 64512
            %627 = vst.msk [vmem:[#allocation5] sm:$0xff] %vm626, 0.0
          $region88: #{tpu_custom_call.1} parent=83 // pred_fallthru
            _
          %p628 = scmp.eq.s32.totalorder %s40, %s38
          // Predicated region
          $region89: #{tpu_custom_call.1} parent=83 // pred_check
            %p629 = pneg %p628
          $region90: #{tpu_custom_call.1} parent=83 // pred_check_branch
            %631 = sbr.rel (%p629) target = $region92
          $region91: #{tpu_custom_call.1} parent=83 // pred_region
            %v632 = vld [vmem:[%s438] sm:$0xf]
            %v633 = vld [vmem:[%s438 + $0x4] sm:$0xf]
            %v634 = vld [vmem:[%s438 + $0x8] sm:$0xf]
            %v635 = vld [vmem:[%s438 + $0xc] sm:$0xf]
            %v640 = vunpack.c.l.b16 %v632
            %v641 = vunpack.c.l.b16 %v633
            %v642 = vunpack.c.l.b16 %v634
            %v643 = vunpack.c.l.b16 %v635
            %v644 = vpack.c.b16 %v641, %v640
            %v645 = vpack.c.b16 %v643, %v642
            %vm648 = vcmask 261120
            %v650 = vsel %vm648, %v529, 0
            %652 = vmatprep.subr.bf16.mxu0 0
            %653 = vmatpush1.bf16.msra.mxu0 %v644
            %654 = vmatprep.subr.bf16.mxu0 0
            %655 = vmatpush1.bf16.msra.mxu0 %v645
            %656 = vmatprep.subr.bf16.mxu0 0
            %657 = vmatpush1.bf16.msra.mxu0 0
            %658 = vmatprep.subr.bf16.mxu0 0
            %659 = vmatpush1.bf16.msra.mxu0 0
            %660 = vmatprep.subr.bf16.mxu0 0
            %661 = vmatpush1.bf16.msra.mxu0 0
            %662 = vmatprep.subr.bf16.mxu0 0
            %663 = vmatpush1.bf16.msra.mxu0 0
            %664 = vmatprep.subr.bf16.mxu0 0
            %665 = vmatpush1.bf16.msra.mxu0 0
            %666 = vmatprep.subr.bf16.mxu0 0
            %667 = vmatpush1.bf16.msra.mxu0 0
            %668 = vmatprep.subr.bf16.mxu0 0
            %669 = vmatpush1.bf16.msra.mxu0 0
            %670 = vmatprep.subr.bf16.mxu0 0
            %671 = vmatpush1.bf16.msra.mxu0 0
            %672 = vmatprep.subr.bf16.mxu0 0
            %673 = vmatpush1.bf16.msra.mxu0 0
            %674 = vmatprep.subr.bf16.mxu0 0
            %675 = vmatpush1.bf16.msra.mxu0 0
            %676 = vmatprep.subr.bf16.mxu0 0
            %677 = vmatpush1.bf16.msra.mxu0 0
            %678 = vmatprep.subr.bf16.mxu0 0
            %679 = vmatpush1.bf16.msra.mxu0 0
            %680 = vmatprep.subr.bf16.mxu0 0
            %681 = vmatpush1.bf16.msra.mxu0 0
            %682 = vmatprep.subr.bf16.mxu0 0
            %683 = vmatpush1.bf16.msra.mxu0 0
            %684 = vmatprep.mubr.bf16.mxu0 0
            %685 = vmatmul.mubr.bf16.gmra.mrb[0].mxu0 %v650
            %v686 = vpop.f32.mrb[0].mxu0
            %v687 = vadd.f32 0.0, %v686
            %v688 = vpop.f32.mrb[0].mxu0
            %v689 = vpop.f32.mrb[0].mxu0
            %v690 = vpop.f32.mrb[0].mxu0
            %691 = vdwg.mxu0
            %v692 = vld [vmem:[#allocation17] sm:$0xff]
            %v693 = vld [vmem:[#allocation19] sm:$0xff]
            %v694 = vmul.f32 %v687, %v692
            %696 = vrot.lane.b32.xlu0 %v693, 4
            %v697 = vpop.permute.xlu0 %696
            %v699 = vmul.f32 %v687, %v697
            %701 = vrot.lane.b32.xlu0 %v699, 124
            %v702 = vpop.permute.xlu0 %701
            %v704 = vadd.f32 %v694, %v702
            %706 = vrot.lane.b32.xlu0 %v692, 4
            %v707 = vpop.permute.xlu0 %706
            %v709 = vmul.f32 %v687, %v707
            %v710 = vmul.f32 %v687, %v693
            %712 = vrot.lane.b32.xlu0 %v710, 4
            %v713 = vpop.permute.xlu0 %712
            %v715 = vsub.f32 %v709, %v713
            %vm716 = vcmask 31744
            %v717 = vsel %vm716, %v704, %v715
            %v718 = vpack.c.bf16 %v717, %v717
            %v719 = vld [vmem:[%s447] sm:$0xf]
            %v720 = vld [vmem:[%s447 + $0x4] sm:$0xf]
            %v721 = vld [vmem:[%s447 + $0x8] sm:$0xf]
            %v722 = vld [vmem:[%s447 + $0xc] sm:$0xf]
            %v727 = vunpack.c.l.b16 %v719
            %v728 = vunpack.c.l.b16 %v720
            %v729 = vunpack.c.l.b16 %v721
            %v730 = vunpack.c.l.b16 %v722
            %v731 = vpack.c.b16 %v728, %v727
            %v732 = vpack.c.b16 %v730, %v729
            %735 = vmatprep.subr.bf16.mxu0 0
            %736 = vmatpush1.bf16.msra.mxu0 %v731
            %737 = vmatprep.subr.bf16.mxu0 0
            %738 = vmatpush1.bf16.msra.mxu0 %v732
            %739 = vmatprep.subr.bf16.mxu0 0
            %740 = vmatpush1.bf16.msra.mxu0 0
            %741 = vmatprep.subr.bf16.mxu0 0
            %742 = vmatpush1.bf16.msra.mxu0 0
            %743 = vmatprep.subr.bf16.mxu0 0
            %744 = vmatpush1.bf16.msra.mxu0 0
            %745 = vmatprep.subr.bf16.mxu0 0
            %746 = vmatpush1.bf16.msra.mxu0 0
            %747 = vmatprep.subr.bf16.mxu0 0
            %748 = vmatpush1.bf16.msra.mxu0 0
            %749 = vmatprep.subr.bf16.mxu0 0
            %750 = vmatpush1.bf16.msra.mxu0 0
            %751 = vmatprep.subr.bf16.mxu0 0
            %752 = vmatpush1.bf16.msra.mxu0 0
            %753 = vmatprep.subr.bf16.mxu0 0
            %754 = vmatpush1.bf16.msra.mxu0 0
            %755 = vmatprep.subr.bf16.mxu0 0
            %756 = vmatpush1.bf16.msra.mxu0 0
            %757 = vmatprep.subr.bf16.mxu0 0
            %758 = vmatpush1.bf16.msra.mxu0 0
            %759 = vmatprep.subr.bf16.mxu0 0
            %760 = vmatpush1.bf16.msra.mxu0 0
            %761 = vmatprep.subr.bf16.mxu0 0
            %762 = vmatpush1.bf16.msra.mxu0 0
            %763 = vmatprep.subr.bf16.mxu0 0
            %764 = vmatpush1.bf16.msra.mxu0 0
            %765 = vmatprep.subr.bf16.mxu0 0
            %766 = vmatpush1.bf16.msra.mxu0 0
            %767 = vmatprep.mubr.bf16.mxu0 0
            %768 = vmatmul.mubr.bf16.gmra.mrb[0].mxu0 %v650
            %v769 = vpop.f32.mrb[0].mxu0
            %v770 = vadd.f32 0.0, %v769
            %v771 = vpop.f32.mrb[0].mxu0
            %v772 = vpop.f32.mrb[0].mxu0
            %v773 = vpop.f32.mrb[0].mxu0
            %774 = vdwg.mxu0
            %v775 = vpack.c.bf16 %v770, %v770
            %s776 = smul.addr %s516, 4
            %s777 = scalar_lea.vmem [#allocation6], %s776
            %vm778 = vcmask 60416
            %779 = vst.msk [vmem:[%s777] sm:$0xf] %vm778, %v718
            %s780 = smul.addr %s516, 4
            %s781 = scalar_lea.vmem [#allocation7], %s780
            %782 = vst.msk [vmem:[%s781] sm:$0xf] %vm778, %v775
            %v783 = vld [vmem:[#allocation2] sm:$0xf]
            %vm784 = vcmask 64512
            %v786 = vsel %vm784, %v783, 0
            %v789 = vsel %vm784, %v718, 0
            %791 = vmatprep.subr.bf16.mxu0 0
            %792 = vmatpush1.bf16.xpose.msra.mxu0 %v789
            %793 = vmatprep.subr.bf16.mxu0 0
            %794 = vmatpush1.bf16.xpose.msra.mxu0 0
            %795 = vmatprep.subr.bf16.mxu0 0
            %796 = vmatpush1.bf16.xpose.msra.mxu0 0
            %797 = vmatprep.subr.bf16.mxu0 0
            %798 = vmatpush1.bf16.xpose.msra.mxu0 0
            %799 = vmatprep.subr.bf16.mxu0 0
            %800 = vmatpush1.bf16.xpose.msra.mxu0 0
            %801 = vmatprep.subr.bf16.mxu0 0
            %802 = vmatpush1.bf16.xpose.msra.mxu0 0
            %803 = vmatprep.subr.bf16.mxu0 0
            %804 = vmatpush1.bf16.xpose.msra.mxu0 0
            %805 = vmatprep.subr.bf16.mxu0 0
            %806 = vmatpush1.bf16.xpose.msra.mxu0 0
            %807 = vmatprep.subr.bf16.mxu0 0
            %808 = vmatpush1.bf16.xpose.msra.mxu0 0
            %809 = vmatprep.subr.bf16.mxu0 0
            %810 = vmatpush1.bf16.xpose.msra.mxu0 0
            %811 = vmatprep.subr.bf16.mxu0 0
            %812 = vmatpush1.bf16.xpose.msra.mxu0 0
            %813 = vmatprep.subr.bf16.mxu0 0
            %814 = vmatpush1.bf16.xpose.msra.mxu0 0
            %815 = vmatprep.subr.bf16.mxu0 0
            %816 = vmatpush1.bf16.xpose.msra.mxu0 0
            %817 = vmatprep.subr.bf16.mxu0 0
            %818 = vmatpush1.bf16.xpose.msra.mxu0 0
            %819 = vmatprep.subr.bf16.mxu0 0
            %820 = vmatpush1.bf16.xpose.msra.mxu0 0
            %821 = vmatprep.subr.bf16.mxu0 0
            %822 = vmatpush1.bf16.xpose.msra.mxu0 0
            %823 = vmatprep.mubr.bf16.mxu0 0
            %824 = vmatmul.mubr.bf16.gmra.mrb[0].mxu0 %v786
            %v825 = vpop.f32.mrb[0].mxu0
            %v826 = vadd.f32 0.0, %v825
            %v827 = vpop.f32.mrb[0].mxu0
            %v828 = vpop.f32.mrb[0].mxu0
            %v829 = vpop.f32.mrb[0].mxu0
            %830 = vdwg.mxu0
            %v831 = vlaneseq
            %v832 = vshrl.u32 %v831, 7
            %v833 = vlaneseq
            %v834 = vand.u32 %v833, 127
            %vm835 = vcmp.ge.s32.totalorder %v832, %v834
            %v836 = vsel %vm835, %v826, -1e+30
            %v837 = vld [vmem:[#allocation3] sm:$0xff]
            %v838 = vsel %vm784, %v836, -inf
            %839 = vmax.xlane.f32.xlu0 %v838
            %v840 = vpop.xlane.xlu0 %839
            %v841 = vmax.f32 %v837, %v840
            %v842 = vsub.f32 %v837, %v841
            %v843 = vmul.f32 %v842, 1.442695
            %v844 = vpow.pop %v843
            %846 = vset.pattern.permute.xlu0 0
            %847 = vperm.xlu0 %846, %v841
            %v848 = vpop.permute.xlu0 %847
            %v850 = vsub.f32 %v836, %v848
            %v851 = vmul.f32 %v850, 1.442695
            %v852 = vpow.pop %v851
            %v853 = vsel %vm784, %v852, 0.0
            %854 = vadd.xlane.f32.xlu0 %v853
            %v855 = vpop.xlane.xlu0 %854
            %v856 = vpack.c.bf16 %v852, %v852
            %v858 = vsel %vm784, %v856, 0
            %vm860 = vcmask 1043456
            %v862 = vsel %vm860, %v775, 0
            %864 = vmatprep.subr.bf16.mxu0 0
            %865 = vmatpush1.bf16.msra.mxu0 %v862
            %866 = vmatprep.subr.bf16.mxu0 0
            %867 = vmatpush1.bf16.msra.mxu0 0
            %868 = vmatprep.subr.bf16.mxu0 0
            %869 = vmatpush1.bf16.msra.mxu0 0
            %870 = vmatprep.subr.bf16.mxu0 0
            %871 = vmatpush1.bf16.msra.mxu0 0
            %872 = vmatprep.subr.bf16.mxu0 0
            %873 = vmatpush1.bf16.msra.mxu0 0
            %874 = vmatprep.subr.bf16.mxu0 0
            %875 = vmatpush1.bf16.msra.mxu0 0
            %876 = vmatprep.subr.bf16.mxu0 0
            %877 = vmatpush1.bf16.msra.mxu0 0
            %878 = vmatprep.subr.bf16.mxu0 0
            %879 = vmatpush1.bf16.msra.mxu0 0
            %880 = vmatprep.subr.bf16.mxu0 0
            %881 = vmatpush1.bf16.msra.mxu0 0
            %882 = vmatprep.subr.bf16.mxu0 0
            %883 = vmatpush1.bf16.msra.mxu0 0
            %884 = vmatprep.subr.bf16.mxu0 0
            %885 = vmatpush1.bf16.msra.mxu0 0
            %886 = vmatprep.subr.bf16.mxu0 0
            %887 = vmatpush1.bf16.msra.mxu0 0
            %888 = vmatprep.subr.bf16.mxu0 0
            %889 = vmatpush1.bf16.msra.mxu0 0
            %890 = vmatprep.subr.bf16.mxu0 0
            %891 = vmatpush1.bf16.msra.mxu0 0
            %892 = vmatprep.subr.bf16.mxu0 0
            %893 = vmatpush1.bf16.msra.mxu0 0
            %894 = vmatprep.subr.bf16.mxu0 0
            %895 = vmatpush1.bf16.msra.mxu0 0
            %896 = vmatprep.mubr.bf16.mxu0 0
            %897 = vmatmul.mubr.bf16.gmra.mrb[0].mxu0 %v858
            %v898 = vpop.f32.mrb[0].mxu0
            %v899 = vadd.f32 0.0, %v898
            %v900 = vpop.f32.mrb[0].mxu0
            %v901 = vpop.f32.mrb[0].mxu0
            %v902 = vpop.f32.mrb[0].mxu0
            %903 = vdwg.mxu0
            %v904 = vld [vmem:[#allocation4] sm:$0xff]
            %v905 = vmul.f32 %v844, %v904
            %v906 = vadd.f32 %v905, %v855
            %vm907 = vcmask 7168
            %908 = vst.msk [vmem:[#allocation4] sm:$0xff] %vm907, %v906
            %v909 = vld [vmem:[#allocation5] sm:$0xff]
            %911 = vset.pattern.permute.xlu0 0
            %912 = vperm.xlu0 %911, %v844
            %v913 = vpop.permute.xlu0 %912
            %v915 = vmul.f32 %v913, %v909
            %v916 = vadd.f32 %v915, %v899
            %917 = vst.msk [vmem:[#allocation5] sm:$0xff] %vm784, %v916
            %918 = vst.msk [vmem:[#allocation3] sm:$0xff] %vm907, %v841
          $region92: #{tpu_custom_call.1} parent=83 // pred_fallthru
            _
          %p919 = scmp.lt.s32.totalorder %s40, %s38
          // Predicated region
          $region93: #{tpu_custom_call.1} parent=83 // pred_check
            %p920 = pneg %p919
          $region94: #{tpu_custom_call.1} parent=83 // pred_check_branch
            %922 = sbr.rel (%p920) target = $region96
          $region95: #{tpu_custom_call.1} parent=83 // pred_region
            %s923 = smul.addr %s516, 4
            %s924 = scalar_lea.vmem [#allocation6], %s923
            %v925 = vld [vmem:[%s924] sm:$0xf]
            %s926 = smul.addr %s516, 4
            %s927 = scalar_lea.vmem [#allocation7], %s926
            %v928 = vld [vmem:[%s927] sm:$0xf]
            %v929 = vld [vmem:[#allocation2] sm:$0xf]
            %vm930 = vcmask 64512
            %v932 = vsel %vm930, %v929, 0
            %v935 = vsel %vm930, %v925, 0
            %937 = vmatprep.subr.bf16.mxu0 0
            %938 = vmatpush1.bf16.xpose.msra.mxu0 %v935
            %939 = vmatprep.subr.bf16.mxu0 0
            %940 = vmatpush1.bf16.xpose.msra.mxu0 0
            %941 = vmatprep.subr.bf16.mxu0 0
            %942 = vmatpush1.bf16.xpose.msra.mxu0 0
            %943 = vmatprep.subr.bf16.mxu0 0
            %944 = vmatpush1.bf16.xpose.msra.mxu0 0
            %945 = vmatprep.subr.bf16.mxu0 0
            %946 = vmatpush1.bf16.xpose.msra.mxu0 0
            %947 = vmatprep.subr.bf16.mxu0 0
            %948 = vmatpush1.bf16.xpose.msra.mxu0 0
            %949 = vmatprep.subr.bf16.mxu0 0
            %950 = vmatpush1.bf16.xpose.msra.mxu0 0
            %951 = vmatprep.subr.bf16.mxu0 0
            %952 = vmatpush1.bf16.xpose.msra.mxu0 0
            %953 = vmatprep.subr.bf16.mxu0 0
            %954 = vmatpush1.bf16.xpose.msra.mxu0 0
            %955 = vmatprep.subr.bf16.mxu0 0
            %956 = vmatpush1.bf16.xpose.msra.mxu0 0
            %957 = vmatprep.subr.bf16.mxu0 0
            %958 = vmatpush1.bf16.xpose.msra.mxu0 0
            %959 = vmatprep.subr.bf16.mxu0 0
            %960 = vmatpush1.bf16.xpose.msra.mxu0 0
            %961 = vmatprep.subr.bf16.mxu0 0
            %962 = vmatpush1.bf16.xpose.msra.mxu0 0
            %963 = vmatprep.subr.bf16.mxu0 0
            %964 = vmatpush1.bf16.xpose.msra.mxu0 0
            %965 = vmatprep.subr.bf16.mxu0 0
            %966 = vmatpush1.bf16.xpose.msra.mxu0 0
            %967 = vmatprep.subr.bf16.mxu0 0
            %968 = vmatpush1.bf16.xpose.msra.mxu0 0
            %969 = vmatprep.mubr.bf16.mxu0 0
            %970 = vmatmul.mubr.bf16.gmra.mrb[0].mxu0 %v932
            %v971 = vpop.f32.mrb[0].mxu0
            %v972 = vadd.f32 0.0, %v971
            %v973 = vpop.f32.mrb[0].mxu0
            %v974 = vpop.f32.mrb[0].mxu0
            %v975 = vpop.f32.mrb[0].mxu0
            %976 = vdwg.mxu0
            %v977 = vld [vmem:[#allocation3] sm:$0xff]
            %v978 = vsel %vm930, %v972, -inf
            %979 = vmax.xlane.f32.xlu0 %v978
            %v980 = vpop.xlane.xlu0 %979
            %v981 = vmax.f32 %v977, %v980
            %v982 = vsub.f32 %v977, %v981
            %v983 = vmul.f32 %v982, 1.442695
            %v984 = vpow.pop %v983
            %986 = vset.pattern.permute.xlu0 0
            %987 = vperm.xlu0 %986, %v981
            %v988 = vpop.permute.xlu0 %987
            %v990 = vsub.f32 %v972, %v988
            %v991 = vmul.f32 %v990, 1.442695
            %v992 = vpow.pop %v991
            %v993 = vsel %vm930, %v992, 0.0
            %994 = vadd.xlane.f32.xlu0 %v993
            %v995 = vpop.xlane.xlu0 %994
            %v996 = vpack.c.bf16 %v992, %v992
            %v998 = vsel %vm930, %v996, 0
            %vm1000 = vcmask 1043456
            %v1002 = vsel %vm1000, %v928, 0
            %1004 = vmatprep.subr.bf16.mxu0 0
            %1005 = vmatpush1.bf16.msra.mxu0 %v1002
            %1006 = vmatprep.subr.bf16.mxu0 0
            %1007 = vmatpush1.bf16.msra.mxu0 0
            %1008 = vmatprep.subr.bf16.mxu0 0
            %1009 = vmatpush1.bf16.msra.mxu0 0
            %1010 = vmatprep.subr.bf16.mxu0 0
            %1011 = vmatpush1.bf16.msra.mxu0 0
            %1012 = vmatprep.subr.bf16.mxu0 0
            %1013 = vmatpush1.bf16.msra.mxu0 0
            %1014 = vmatprep.subr.bf16.mxu0 0
            %1015 = vmatpush1.bf16.msra.mxu0 0
            %1016 = vmatprep.subr.bf16.mxu0 0
            %1017 = vmatpush1.bf16.msra.mxu0 0
            %1018 = vmatprep.subr.bf16.mxu0 0
            %1019 = vmatpush1.bf16.msra.mxu0 0
            %1020 = vmatprep.subr.bf16.mxu0 0
            %1021 = vmatpush1.bf16.msra.mxu0 0
            %1022 = vmatprep.subr.bf16.mxu0 0
            %1023 = vmatpush1.bf16.msra.mxu0 0
            %1024 = vmatprep.subr.bf16.mxu0 0
            %1025 = vmatpush1.bf16.msra.mxu0 0
            %1026 = vmatprep.subr.bf16.mxu0 0
            %1027 = vmatpush1.bf16.msra.mxu0 0
            %1028 = vmatprep.subr.bf16.mxu0 0
            %1029 = vmatpush1.bf16.msra.mxu0 0
            %1030 = vmatprep.subr.bf16.mxu0 0
            %1031 = vmatpush1.bf16.msra.mxu0 0
            %1032 = vmatprep.subr.bf16.mxu0 0
            %1033 = vmatpush1.bf16.msra.mxu0 0
            %1034 = vmatprep.subr.bf16.mxu0 0
            %1035 = vmatpush1.bf16.msra.mxu0 0
            %1036 = vmatprep.mubr.bf16.mxu0 0
            %1037 = vmatmul.mubr.bf16.gmra.mrb[0].mxu0 %v998
            %v1038 = vpop.f32.mrb[0].mxu0
            %v1039 = vadd.f32 0.0, %v1038
            %v1040 = vpop.f32.mrb[0].mxu0
            %v1041 = vpop.f32.mrb[0].mxu0
            %v1042 = vpop.f32.mrb[0].mxu0
            %1043 = vdwg.mxu0
            %v1044 = vld [vmem:[#allocation4] sm:$0xff]
            %v1045 = vmul.f32 %v984, %v1044
            %v1046 = vadd.f32 %v1045, %v995
            %vm1047 = vcmask 7168
            %1048 = vst.msk [vmem:[#allocation4] sm:$0xff] %vm1047, %v1046
            %v1049 = vld [vmem:[#allocation5] sm:$0xff]
            %1051 = vset.pattern.permute.xlu0 0
            %1052 = vperm.xlu0 %1051, %v984
            %v1053 = vpop.permute.xlu0 %1052
            %v1055 = vmul.f32 %v1053, %v1049
            %v1056 = vadd.f32 %v1055, %v1039
            %1057 = vst.msk [vmem:[#allocation5] sm:$0xff] %vm930, %v1056
            %1058 = vst.msk [vmem:[#allocation3] sm:$0xff] %vm1047, %v981
          $region96: #{tpu_custom_call.1} parent=83 // pred_fallthru
            _
          // Predicated region
          $region97: #{tpu_custom_call.1} parent=83 // pred_check
            %p1059 = pneg %p628
          $region98: #{tpu_custom_call.1} parent=83 // pred_check_branch
            %1061 = sbr.rel (%p1059) target = $region100
          $region99: #{tpu_custom_call.1} parent=83 // pred_region
            %v1062 = vld [vmem:[#allocation5] sm:$0xff]
            %v1063 = vld [vmem:[#allocation4] sm:$0xff]
            %1065 = vset.pattern.permute.xlu0 0
            %1066 = vperm.xlu0 %1065, %v1063
            %v1067 = vpop.permute.xlu0 %1066
            %v1069 = vrcp.pop %v1067
            %v1070 = vmul.f32 %v1062, %v1069
            %v1071 = vld [vmem:[%s514] sm:$0xff]
            %v1072 = vpack.c.bf16 %v1070, %v1070
            %v1073 = vld [vmem:[%s456] sm:$0xf]
            %vm1074 = vcmask 64512
            %v1076 = vsel %vm1074, %v1072, 0
            %vm1078 = vcmask 1043456
            %v1080 = vsel %vm1078, %v1073, 0
            %1082 = vmatprep.subr.bf16.mxu0 0
            %1083 = vmatpush1.bf16.msra.mxu0 %v1080
            %1084 = vmatprep.subr.bf16.mxu0 0
            %1085 = vmatpush1.bf16.msra.mxu0 0
            %1086 = vmatprep.subr.bf16.mxu0 0
            %1087 = vmatpush1.bf16.msra.mxu0 0
            %1088 = vmatprep.subr.bf16.mxu0 0
            %1089 = vmatpush1.bf16.msra.mxu0 0
            %1090 = vmatprep.subr.bf16.mxu0 0
            %1091 = vmatpush1.bf16.msra.mxu0 0
            %1092 = vmatprep.subr.bf16.mxu0 0
            %1093 = vmatpush1.bf16.msra.mxu0 0
            %1094 = vmatprep.subr.bf16.mxu0 0
            %1095 = vmatpush1.bf16.msra.mxu0 0
            %1096 = vmatprep.subr.bf16.mxu0 0
            %1097 = vmatpush1.bf16.msra.mxu0 0
            %1098 = vmatprep.subr.bf16.mxu0 0
            %1099 = vmatpush1.bf16.msra.mxu0 0
            %1100 = vmatprep.subr.bf16.mxu0 0
            %1101 = vmatpush1.bf16.msra.mxu0 0
            %1102 = vmatprep.subr.bf16.mxu0 0
            %1103 = vmatpush1.bf16.msra.mxu0 0
            %1104 = vmatprep.subr.bf16.mxu0 0
            %1105 = vmatpush1.bf16.msra.mxu0 0
            %1106 = vmatprep.subr.bf16.mxu0 0
            %1107 = vmatpush1.bf16.msra.mxu0 0
            %1108 = vmatprep.subr.bf16.mxu0 0
            %1109 = vmatpush1.bf16.msra.mxu0 0
            %1110 = vmatprep.subr.bf16.mxu0 0
            %1111 = vmatpush1.bf16.msra.mxu0 0
            %1112 = vmatprep.subr.bf16.mxu0 0
            %1113 = vmatpush1.bf16.msra.mxu0 0
            %1114 = vmatprep.mubr.bf16.mxu0 0
            %1115 = vmatmul.mubr.bf16.gmra.mrb[0].mxu0 %v1076
            %v1116 = vpop.f32.mrb[0].mxu0
            %v1117 = vadd.f32 0.0, %v1116
            %v1118 = vpop.f32.mrb[0].mxu0
            %v1119 = vpop.f32.mrb[0].mxu0
            %v1120 = vpop.f32.mrb[0].mxu0
            %1121 = vdwg.mxu0
            %v1122 = vadd.f32 %v1071, %v1117
            %vm1123 = vcmask 261120
            %1124 = vst.msk [vmem:[%s514] sm:$0xff] %vm1123, %v1122
          $region100: #{tpu_custom_call.1} parent=83 // pred_fallthru
            _
        $region84: #{tpu_custom_call.1} parent=47 // pred_fallthru
          _
        %s1125 = sand.u32 %s251, 1
        %s1126 = scalar_lea.sflag [#allocation10], %s1125
        %s1127 = sand.u32 %s251, 1
        %s1128 = smul.addr %s1127, 8
        %s1129 = scalar_lea.vmem [#allocation20], %s1128
        // Predicated region
        $region101: #{tpu_custom_call.1} parent=47 // pred_check
          %p1130 = pneg %p261
        $region102: #{tpu_custom_call.1} parent=47 // pred_check_branch
          %1132 = sbr.rel (%p1130) target = $region104
        $region103: #{tpu_custom_call.1} parent=47 // pred_region
          %s1134 = ssub.s32 128, 128
          %1135 = vsyncadd %s1126, %s1134
          %s1136 = sadd.s32 %s38, %s37
          %s1137 = smul.addr %s1136, 128
          %s1138 = scalar_lea.hbm %s7, %s1137
          %s1140 = sshll.u32 %s1129, 4
          %s1141 = int_to_ptr.vmem [resolvable:$true] %s1140
          %1143 = dma.vmem_to_hbm [thread:$0]  %s1141, 128, %s1138, %s1126
        $region104: #{tpu_custom_call.1} parent=47 // pred_fallthru
          _
      $region48: #{tpu_custom_call.1} parent=5 // pred_fallthru
        _
      %p1144 = scmp.le.s32.totalorder 2, %s26
      // Predicated region
      $region105: #{tpu_custom_call.1} parent=5 // pred_check
        %p1145 = pneg %p1144
      $region106: #{tpu_custom_call.1} parent=5 // pred_check_branch
        %1147 = sbr.rel (%p1145) target = $region108
      $region107: #{tpu_custom_call.1} parent=5 // pred_region
        %s1148 = ssub.s32 %s26, 2
        // Predicated region
        $region109: #{tpu_custom_call.1} parent=107 // pred_check
          %p1149 = pneg %p267
        $region110: #{tpu_custom_call.1} parent=107 // pred_check_branch
          %1151 = sbr.rel (%p1149) target = $region112
        $region111: #{tpu_custom_call.1} parent=107 // pred_region
          %s1152 = sand.u32 %s252, 1
          %s1153 = scalar_lea.sflag [#allocation10], %s1152
          %s1154 = sand.u32 %s252, 1
          %s1155 = smul.addr %s1154, 8
          %s1156 = scalar_lea.vmem [#allocation20], %s1155
          %1157 = dma.done %s1153, 128
        $region112: #{tpu_custom_call.1} parent=107 // pred_fallthru
          _
      $region108: #{tpu_custom_call.1} parent=5 // pred_fallthru
        _
    $region6: #{tpu_custom_call.1} parent=1 // loop_footer
      %s30 = sadd.s32 1, %s26
    $region7: #{tpu_custom_call.1} parent=1 // loop_footer_branch
      %25 = sbr.rel target = $region3
    $region8: #{tpu_custom_call.1} parent=1 // loop_exit
      _
    %1158 = vsyncpa [#allocation9], 1
    %s1159 = scalar_lea.sflag [#allocation9], 1
    %1160 = vsyncpa %s1159, 1
    %1161 = vsyncpa [#allocation12], 1
    %s1162 = scalar_lea.sflag [#allocation12], 1
    %1163 = vsyncpa %s1162, 1
    %1164 = vsyncpa [#allocation15], 1
    %s1165 = scalar_lea.sflag [#allocation15], 1
    %1166 = vsyncpa %s1165, 1
    %1167 = vsyncpa [#allocation18], 1
    %1168 = vsyncpa [#allocation10], 1
    %s1169 = scalar_lea.sflag [#allocation10], 1
    %1170 = vsyncpa %s1169, 1

</llo_original>
